<compile_context>
chip_gen: v7x
topology: tpu7x:2x2x1
jax: 0.10.0
libtpu: 0.0.40
codegen_flags: <defaults>
</compile_context>

<pallas_src>
import functools

import jax
import jax.numpy as jnp
from jax import lax
from jax.experimental import pallas as pl
from jax.experimental.pallas import tpu as pltpu

LEAKY_SLOPE = 0.1
BN_EPS = 1e-3
LANE = 128


def _round_up(x, m):
    return (x + m - 1) // m * m


def _cdiv(a, b):
    return -(-a // b)


def _vmem_budget_bytes():
    """~75% of per-core VMEM (v5e/v6e: 128 MiB -> 96 MiB, v7x: 64 MiB -> 48 MiB)."""
    cap = 64 * 1024 * 1024
    try:
        info = pltpu.get_tpu_info()
        cap = int(getattr(info, "vmem_capacity_bytes", cap))
    except Exception:
        pass
    return max(32 * 1024 * 1024, min(96 * 1024 * 1024, (cap * 3) // 4))


_VMEM_BUDGET = _vmem_budget_bytes()
# Per-generation tile preferences: large-VMEM chips (v5e/v6e, 128 MiB) get
# tm=2048; v7x (64 MiB) keeps tm=1024.  Working set stays ~18-32 MB, well
# inside the vmem limit, and tn=512 keeps the output lane-dense while limiting
# patch re-reads across the N axis to <=2 for Darknet channel counts.
if _VMEM_BUDGET >= 80 * 1024 * 1024:
    _TM, _TN, _TK_CAP = 2048, 512, 2304
else:
    _TM, _TN, _TK_CAP = 1024, 512, 2304


def _pick_m(m):
    """(tile_m, padded_m): minimal 128-aligned padding, >=2 tiles when possible
    so both v7x TensorCores get work on small (e.g. 1x1-conv) layers."""
    mp = _round_up(m, LANE)
    nt = _cdiv(mp, _TM)
    if nt == 1 and mp > LANE:
        nt = 2
    tm = _round_up(_cdiv(mp, nt), LANE)
    return tm, tm * nt


def _pick_nk(dim, cap):
    """Tile for an already-128-aligned dim: the whole dim if it fits under
    `cap`, else the largest 128-multiple divisor <= cap (no padding blow-up)."""
    dp = _round_up(dim, LANE)
    if dp <= cap:
        return dp, dp
    for cand in range(cap - cap % LANE, 0, -LANE):
        if dp % cand == 0:
            return cand, dp
    return LANE, dp  # unreachable for 128-aligned dp


# ---------------------------- Pallas kernels ---------------------------------

def _mm_bias_leaky_kernel(p_ref, w_ref, b_ref, o_ref, acc_ref):
    # (tm, tk)bf16 @ (tk, tn)bf16 accumulated in f32 across the K grid axis,
    # epilogue (bias + LeakyReLU) only on the last K step.
    @pl.when(pl.program_id(2) == 0)
    def _():
        acc_ref[...] = jnp.zeros_like(acc_ref)

    acc_ref[...] += jnp.dot(p_ref[...], w_ref[...],
                            preferred_element_type=jnp.float32)

    @pl.when(pl.program_id(2) == pl.num_programs(2) - 1)
    def _():
        y = acc_ref[...] + b_ref[...]
        o_ref[...] = jnp.maximum(y, LEAKY_SLOPE * y).astype(o_ref.dtype)


def _mm_bias_leaky_res_kernel(p_ref, w_ref, b_ref, r_ref, o_ref, acc_ref):
    @pl.when(pl.program_id(2) == 0)
    def _():
        acc_ref[...] = jnp.zeros_like(acc_ref)

    acc_ref[...] += jnp.dot(p_ref[...], w_ref[...],
                            preferred_element_type=jnp.float32)

    @pl.when(pl.program_id(2) == pl.num_programs(2) - 1)
    def _():
        y = acc_ref[...] + b_ref[...]
        y = jnp.maximum(y, LEAKY_SLOPE * y)
        o_ref[...] = (r_ref[...].astype(jnp.float32) + y).astype(o_ref.dtype)


def fused_conv_matmul(patches, w_packed, bias, residual=None):
    """y = leaky(patches @ w_packed + bias) [+ residual], tiled on the MXU.

    patches:  (M, K) bf16 with K <= Kp (tap order kh, kw, ci).
    w_packed: (Kp, Np) bf16, BN scale folded in, zero padded to 128-aligned Kp/Np.
    bias:     (1, Np) f32.
    residual: (Mp, Np) bf16 or None (Mp = padded M; aliased with the output).
    Returns the *padded* (Mp, Np) bf16 activation (kept padded between layers).
    """
    M, K = patches.shape
    Kp, Np = w_packed.shape
    tm, Mp = _pick_m(M)
    tn, _ = _pick_nk(Np, _TN)
    tk, _ = _pick_nk(Kp, _TK_CAP)

    if (Mp, Kp) != (M, K):
        patches = jnp.pad(patches, ((0, Mp - M), (0, Kp - K)))
    patches = patches.astype(jnp.bfloat16)  # no-op on the bf16 path

    grid = (Mp // tm, Np // tn, Kp // tk)
    p_spec = pl.BlockSpec((tm, tk), lambda i, j, k: (i, k))
    w_spec = pl.BlockSpec((tk, tn), lambda i, j, k: (k, j))
    b_spec = pl.BlockSpec((1, tn), lambda i, j, k: (0, j))
    o_spec = pl.BlockSpec((tm, tn), lambda i, j, k: (i, j))

    compiler_params = pltpu.CompilerParams(
        dimension_semantics=("parallel", "parallel", "arbitrary"),
        vmem_limit_bytes=_VMEM_BUDGET,
    )
    out_shape = jax.ShapeDtypeStruct((Mp, Np), jnp.bfloat16)
    scratch = [pltpu.VMEM((tm, tn), jnp.float32)]

    if residual is None:
        return pl.pallas_call(
            _mm_bias_leaky_kernel,
            out_shape=out_shape,
            grid=grid,
            in_specs=[p_spec, w_spec, b_spec],
            out_specs=o_spec,
            scratch_shapes=scratch,
            compiler_params=compiler_params,
        )(patches, w_packed, bias)

    assert residual.shape == (Mp, Np), (residual.shape, (Mp, Np))
    residual = residual.astype(jnp.bfloat16)
    return pl.pallas_call(
        _mm_bias_leaky_res_kernel,
        out_shape=out_shape,
        grid=grid,
        in_specs=[p_spec, w_spec, b_spec, o_spec],
        out_specs=o_spec,
        scratch_shapes=scratch,
        input_output_aliases={3: 0},  # residual buffer reused as the output
        compiler_params=compiler_params,
    )(patches, w_packed, bias, residual)


# ------------------------------ JAX glue --------------------------------------

def _im2col_3x3(x, stride, pad):
    """x: (N, H, W, C) -> ((N*Ho*Wo, 9*C) in x.dtype, (N, Ho, Wo)); tap order (kh, kw, ci)."""
    if pad:
        x = jnp.pad(x, ((0, 0), (pad, pad), (pad, pad), (0, 0)))
    n, h, w, c = x.shape
    ho = (h - 3) // stride + 1
    wo = (w - 3) // stride + 1
    cols = [x[:, kh:kh + stride * (ho - 1) + 1:stride,
              kw:kw + stride * (wo - 1) + 1:stride, :]
            for kh in range(3) for kw in range(3)]
    patches = jnp.concatenate(cols, axis=-1)  # (N, Ho, Wo, 9*C)
    return patches.reshape(n * ho * wo, 9 * c), (n, ho, wo)


def _fold_bn(gamma, beta, mean, var):
    scale = gamma / jnp.sqrt(var + BN_EPS)
    return scale, beta - mean * scale


def pack_params(params):
    """Fold BN into the conv weights, zero-pad to 128-aligned (Kp, Np) bf16 and
    pad the biases, once, outside the forward path."""
    cout = params['dark']['w'].shape[-1]
    npc = _round_up(cout, LANE)

    def pack(w2d, bn, kp, np_):
        scale, bias = _fold_bn(**bn)
        k, co = w2d.shape
        w = jnp.pad(w2d * scale[None, :], ((0, kp - k), (0, np_ - co)))
        b = jnp.pad(bias, (0, np_ - co)).reshape(1, np_).astype(jnp.float32)
        return w.astype(jnp.bfloat16), b

    dw = params['dark']['w'].reshape(-1, cout)  # HWIO -> (9*Cin, Cout)
    wd, bd = pack(dw, params['dark']['bn'], _round_up(dw.shape[0], LANE), npc)
    packed = {'dark': {'w': wd, 'b': bd}, 'res': []}
    for blk in params['res']:
        half = blk['w1'].shape[-1]
        nph = _round_up(half, LANE)
        # 1x1 conv consumes the padded activation directly -> pad its K to npc.
        w1p, b1 = pack(blk['w1'].reshape(cout, half), blk['bn1'], npc, nph)
        # 3x3 conv consumes channel-padded patches -> pad ci to nph per tap.
        w2 = jnp.pad(blk['w2'], ((0, 0), (0, 0), (0, nph - half), (0, 0)))
        w2p, b2 = pack(w2.reshape(9 * nph, cout), blk['bn2'], 9 * nph, npc)
        packed['res'].append({'w1': w1p, 'b1': b1, 'w2': w2p, 'b2': b2})
    return packed


def resblock_forward(x_nchw, packed, out_channels):
    """Pallas forward.  Activations flow between layers as lane-padded bf16
    (Mp, 128-aligned C) buffers; padded rows/columns stay inert (zero weights /
    zero columns) and are sliced off only where spatial structure is needed."""
    x = jnp.transpose(x_nchw, (0, 2, 3, 1)).astype(jnp.bfloat16)  # NCHW -> NHWC bf16
    # nn.ZeroPad2d((1, 0, 1, 0)): left=1, right=0, top=1, bottom=0
    x = jnp.pad(x, ((0, 0), (1, 0), (1, 0), (0, 0)))
    # darkconv: Conv2d(in, out, 3, stride=2, padding=0, bias=False) + BN + LeakyReLU
    patches, (n, ho, wo) = _im2col_3x3(x, stride=2, pad=0)
    x = fused_conv_matmul(patches, packed['dark']['w'], packed['dark']['b'])
    m = n * ho * wo
    for blk in packed['res']:
        flat = x  # (Mp, Npc) bf16, also the residual
        # darkconv_1: 1x1 conv C -> C//2 (+ BN + LeakyReLU); consumes the padded
        # buffer directly (padded channels are zero and hit zero weight rows).
        y1 = fused_conv_matmul(flat, blk['w1'], blk['b1'])
        chp = blk['w1'].shape[1]  # 128-aligned C//2
        y1_img = y1[:m].reshape(n, ho, wo, chp)
        # darkconv_2: 3x3 conv pad=1, C//2 -> C (+ BN + LeakyReLU), fused residual
        patches2, _ = _im2col_3x3(y1_img, stride=1, pad=1)
        x = fused_conv_matmul(patches2, blk['w2'], blk['b2'], residual=flat)
    out = x[:m, :out_channels].astype(jnp.float32).reshape(n, ho, wo, out_channels)
    return jnp.transpose(out, (0, 3, 1, 2))  # back to NCHW


# --------------------------- parameter init -----------------------------------

def init_params(key, in_channels, out_channels, num_blocks):
    def bn_init(k, c):
        k1, k2, k3, k4 = jax.random.split(k, 4)
        return dict(
            gamma=1.0 + 0.1 * jax.random.normal(k1, (c,), jnp.float32),
            beta=0.1 * jax.random.normal(k2, (c,), jnp.float32),
            mean=0.1 * jax.random.normal(k3, (c,), jnp.float32),
            var=0.5 + jnp.abs(jax.random.normal(k4, (c,), jnp.float32)),
        )

    half = out_channels // 2
    key, kw, kb = jax.random.split(key, 3)
    params = {
        'dark': dict(  # weights stored HWIO
            w=0.1 * jax.random.normal(kw, (3, 3, in_channels, out_channels), jnp.float32),
            bn=bn_init(kb, out_channels),
        ),
        'res': [],
    }
    for _ in range(num_blocks):
        key, k1, k2, k3, k4 = jax.random.split(key, 5)
        params['res'].append(dict(
            w1=0.1 * jax.random.normal(k1, (1, 1, out_channels, half), jnp.float32),
            bn1=bn_init(k2, half),
            w2=0.1 * jax.random.normal(k3, (3, 3, half, out_channels), jnp.float32),
            bn2=bn_init(k4, out_channels),
        ))
    return params


# --------------------------- pure-JAX reference --------------------------------

def _conv_bn_leaky_ref(x, w, bn, stride, pad):
    y = lax.conv_general_dilated(
        x, w, window_strides=(stride, stride),
        padding=[(pad, pad), (pad, pad)],
        dimension_numbers=('NHWC', 'HWIO', 'NHWC'))
    s, b = _fold_bn(**bn)
    y = y * s.reshape(1, 1, 1, -1) + b.reshape(1, 1, 1, -1)
    return jnp.where(y >= 0, y, LEAKY_SLOPE * y)


def resblock_ref(x_nchw, params):
    x = jnp.transpose(x_nchw, (0, 2, 3, 1)).astype(jnp.float32)
    x = jnp.pad(x, ((0, 0), (1, 0), (1, 0), (0, 0)))
    x = _conv_bn_leaky_ref(x, params['dark']['w'], params['dark']['bn'], 2, 0)
    for blk in params['res']:
        y = _conv_bn_leaky_ref(x, blk['w1'], blk['bn1'], 1, 0)
        y = _conv_bn_leaky_ref(y, blk['w2'], blk['bn2'], 1, 1)
        x = x + y
    return jnp.transpose(x, (0, 3, 1, 2))


# ------------------------------- main ------------------------------------------

if __name__ == "__main__":
    key = jax.random.PRNGKey(0)
    kx, kp = jax.random.split(key)
    in_channels, out_channels, num_blocks = 4, 8, 2
    x = jax.random.normal(kx, (2, in_channels, 16, 16), jnp.float32)  # NCHW
    params = init_params(kp, in_channels, out_channels, num_blocks)

    packed = pack_params(params)  # one-time weight fold / pad / bf16 cast
    fwd = jax.jit(functools.partial(resblock_forward, out_channels=out_channels))
    out = jax.block_until_ready(fwd(x, packed))

    ref = jax.block_until_ready(resblock_ref(x, params))
    assert out.shape == (2, out_channels, 8, 8), out.shape
    # bf16 data path (f32 accumulation) -> loosened tolerance vs f32 reference.
    max_err = float(jnp.max(jnp.abs(out - ref)))
    assert jnp.allclose(out, ref, atol=5e-2, rtol=5e-2), max_err

    print("KERNEL_OK")
</pallas_src>

<mosaic_0001>
module attributes {stable_mosaic.version = 11 : i64} {
  func.func @_mm_bias_leaky_kernel(%arg0: i32, %arg1: i32, %arg2: i32, %arg3: memref<128x128xbf16, #tpu.memory_space<vmem>>, %arg4: memref<128x128xbf16, #tpu.memory_space<vmem>>, %arg5: memref<1x128xf32, #tpu.memory_space<vmem>>, %arg6: memref<128x128xbf16, #tpu.memory_space<vmem>>, %arg7: memref<128x128xf32, #tpu.memory_space<vmem>>) attributes {dimension_semantics = [#tpu.dimension_semantics<parallel>, #tpu.dimension_semantics<parallel>, #tpu.dimension_semantics<arbitrary>], iteration_bounds = array<i64: 1, 1, 1>, scalar_prefetch = 0 : i64, scratch_operands = 1 : i64, tpu.core_type = #tpu.core_type<tc>, window_params = [{transform_indices = @transform_0, window_bounds = array<i64: 128, 128>}, {transform_indices = @transform_1, window_bounds = array<i64: 128, 128>}, {transform_indices = @transform_2, window_bounds = array<i64: 1, 128>}, {transform_indices = @transform_3, window_bounds = array<i64: 128, 128>}]} {
    %c0_i32 = arith.constant 0 : i32
    %0 = arith.cmpi eq, %arg2, %c0_i32 : i32
    %1 = arith.extui %0 : i1 to i32
    %c0_i32_0 = arith.constant 0 : i32
    %2 = arith.cmpi ne, %1, %c0_i32_0 : i32
    scf.if %2 {
      %cst_10 = arith.constant 0.000000e+00 : f32
      %12 = vector.broadcast %cst_10 : f32 to vector<128x128xf32>
      %c0_11 = arith.constant 0 : index
      %c0_12 = arith.constant 0 : index
      %13 = vector.load %arg7[%c0_11, %c0_12] : memref<128x128xf32, #tpu.memory_space<vmem>>, vector<128x128xf32>
      tpu.vector_store %arg7[%c0_11, %c0_12], %12 {strides = array<i32>} : memref<128x128xf32, #tpu.memory_space<vmem>>, vector<128x128xf32>,
    } else {
    }
    %c0 = arith.constant 0 : index
    %c0_1 = arith.constant 0 : index
    %3 = vector.load %arg7[%c0, %c0_1] : memref<128x128xf32, #tpu.memory_space<vmem>>, vector<128x128xf32>
    %c0_2 = arith.constant 0 : index
    %c0_3 = arith.constant 0 : index
    %4 = vector.load %arg3[%c0_2, %c0_3] : memref<128x128xbf16, #tpu.memory_space<vmem>>, vector<128x128xbf16>
    %c0_4 = arith.constant 0 : index
    %c0_5 = arith.constant 0 : index
    %5 = vector.load %arg4[%c0_4, %c0_5] : memref<128x128xbf16, #tpu.memory_space<vmem>>, vector<128x128xbf16>
    %cst = arith.constant dense<0.000000e+00> : vector<128x128xf32>
    %6 = tpu.matmul %4, %5, %cst {dimension_numbers = #tpu.dot_dimension_numbers<[1], [0], [0], [1], [0, 0, 1, 1], [], []>} : vector<128x128xbf16>, vector<128x128xbf16>, vector<128x128xf32> -> vector<128x128xf32>
    %7 = arith.addf %3, %6 : vector<128x128xf32>
    %c0_6 = arith.constant 0 : index
    %c0_7 = arith.constant 0 : index
    %8 = vector.load %arg7[%c0_6, %c0_7] : memref<128x128xf32, #tpu.memory_space<vmem>>, vector<128x128xf32>
    tpu.vector_store %arg7[%c0_6, %c0_7], %7 {strides = array<i32>} : memref<128x128xf32, #tpu.memory_space<vmem>>, vector<128x128xf32>,
    %c0_i32_8 = arith.constant 0 : i32
    %9 = arith.cmpi eq, %arg2, %c0_i32_8 : i32
    %10 = arith.extui %9 : i1 to i32
    %c0_i32_9 = arith.constant 0 : i32
    %11 = arith.cmpi ne, %10, %c0_i32_9 : i32
    scf.if %11 {
      %c0_10 = arith.constant 0 : index
      %c0_11 = arith.constant 0 : index
      %12 = vector.load %arg7[%c0_10, %c0_11] : memref<128x128xf32, #tpu.memory_space<vmem>>, vector<128x128xf32>
      %c0_12 = arith.constant 0 : index
      %c0_13 = arith.constant 0 : index
      %13 = vector.load %arg5[%c0_12, %c0_13] : memref<1x128xf32, #tpu.memory_space<vmem>>, vector<1x128xf32>
      %14 = vector.broadcast %13 : vector<1x128xf32> to vector<128x128xf32>
      %15 = arith.addf %12, %14 : vector<128x128xf32>
      %cst_14 = arith.constant 1.000000e-01 : f32
      %16 = vector.broadcast %cst_14 : f32 to vector<128x128xf32>
      %17 = arith.mulf %16, %15 : vector<128x128xf32>
      %18 = arith.maximumf %15, %17 : vector<128x128xf32>
      %19 = arith.truncf %18 : vector<128x128xf32> to vector<128x128xbf16>
      %c0_15 = arith.constant 0 : index
      %c0_16 = arith.constant 0 : index
      %20 = vector.load %arg6[%c0_15, %c0_16] : memref<128x128xbf16, #tpu.memory_space<vmem>>, vector<128x128xbf16>
      tpu.vector_store %arg6[%c0_15, %c0_16], %19 {strides = array<i32>} : memref<128x128xbf16, #tpu.memory_space<vmem>>, vector<128x128xbf16>,
    } else {
    }
    return
  }
  func.func @transform_0(%arg0: i32, %arg1: i32, %arg2: i32) -> (i32, i32) {
    %c0_i32 = arith.constant 0 : i32
    return %arg0, %arg2 : i32, i32
  }
  func.func @transform_1(%arg0: i32, %arg1: i32, %arg2: i32) -> (i32, i32) {
    %c0_i32 = arith.constant 0 : i32
    return %arg2, %arg1 : i32, i32
  }
  func.func @transform_2(%arg0: i32, %arg1: i32, %arg2: i32) -> (i32, i32) {
    %c0_i32 = arith.constant 0 : i32
    %c0_i32_0 = arith.constant 0 : i32
    return %c0_i32, %arg1 : i32, i32
  }
  func.func @transform_3(%arg0: i32, %arg1: i32, %arg2: i32) -> (i32, i32) {
    %c0_i32 = arith.constant 0 : i32
    return %arg0, %arg1 : i32, i32
  }
}

module attributes {stable_mosaic.version = 11 : i64} {
  func.func @_mm_bias_leaky_res_kernel(%arg0: i32, %arg1: i32, %arg2: i32, %arg3: memref<128x1152xbf16, #tpu.memory_space<vmem>>, %arg4: memref<1152x128xbf16, #tpu.memory_space<vmem>>, %arg5: memref<1x128xf32, #tpu.memory_space<vmem>>, %arg6: memref<128x128xbf16, #tpu.memory_space<vmem>>, %arg7: memref<128x128xbf16, #tpu.memory_space<vmem>>, %arg8: memref<128x128xf32, #tpu.memory_space<vmem>>) attributes {dimension_semantics = [#tpu.dimension_semantics<parallel>, #tpu.dimension_semantics<parallel>, #tpu.dimension_semantics<arbitrary>], iteration_bounds = array<i64: 1, 1, 1>, scalar_prefetch = 0 : i64, scratch_operands = 1 : i64, tpu.core_type = #tpu.core_type<tc>, window_params = [{transform_indices = @transform_0, window_bounds = array<i64: 128, 1152>}, {transform_indices = @transform_1, window_bounds = array<i64: 1152, 128>}, {transform_indices = @transform_2, window_bounds = array<i64: 1, 128>}, {transform_indices = @transform_3, window_bounds = array<i64: 128, 128>}, {transform_indices = @transform_4, window_bounds = array<i64: 128, 128>}]} {
    %c0_i32 = arith.constant 0 : i32
    %0 = arith.cmpi eq, %arg2, %c0_i32 : i32
    %1 = arith.extui %0 : i1 to i32
    %c0_i32_0 = arith.constant 0 : i32
    %2 = arith.cmpi ne, %1, %c0_i32_0 : i32
    scf.if %2 {
      %cst_10 = arith.constant 0.000000e+00 : f32
      %12 = vector.broadcast %cst_10 : f32 to vector<128x128xf32>
      %c0_11 = arith.constant 0 : index
      %c0_12 = arith.constant 0 : index
      %13 = vector.load %arg8[%c0_11, %c0_12] : memref<128x128xf32, #tpu.memory_space<vmem>>, vector<128x128xf32>
      tpu.vector_store %arg8[%c0_11, %c0_12], %12 {strides = array<i32>} : memref<128x128xf32, #tpu.memory_space<vmem>>, vector<128x128xf32>,
    } else {
    }
    %c0 = arith.constant 0 : index
    %c0_1 = arith.constant 0 : index
    %3 = vector.load %arg8[%c0, %c0_1] : memref<128x128xf32, #tpu.memory_space<vmem>>, vector<128x128xf32>
    %c0_2 = arith.constant 0 : index
    %c0_3 = arith.constant 0 : index
    %4 = vector.load %arg3[%c0_2, %c0_3] : memref<128x1152xbf16, #tpu.memory_space<vmem>>, vector<128x1152xbf16>
    %c0_4 = arith.constant 0 : index
    %c0_5 = arith.constant 0 : index
    %5 = vector.load %arg4[%c0_4, %c0_5] : memref<1152x128xbf16, #tpu.memory_space<vmem>>, vector<1152x128xbf16>
    %cst = arith.constant dense<0.000000e+00> : vector<128x128xf32>
    %6 = tpu.matmul %4, %5, %cst {dimension_numbers = #tpu.dot_dimension_numbers<[1], [0], [0], [1], [0, 0, 1, 1], [], []>} : vector<128x1152xbf16>, vector<1152x128xbf16>, vector<128x128xf32> -> vector<128x128xf32>
    %7 = arith.addf %3, %6 : vector<128x128xf32>
    %c0_6 = arith.constant 0 : index
    %c0_7 = arith.constant 0 : index
    %8 = vector.load %arg8[%c0_6, %c0_7] : memref<128x128xf32, #tpu.memory_space<vmem>>, vector<128x128xf32>
    tpu.vector_store %arg8[%c0_6, %c0_7], %7 {strides = array<i32>} : memref<128x128xf32, #tpu.memory_space<vmem>>, vector<128x128xf32>,
    %c0_i32_8 = arith.constant 0 : i32
    %9 = arith.cmpi eq, %arg2, %c0_i32_8 : i32
    %10 = arith.extui %9 : i1 to i32
    %c0_i32_9 = arith.constant 0 : i32
    %11 = arith.cmpi ne, %10, %c0_i32_9 : i32
    scf.if %11 {
      %c0_10 = arith.constant 0 : index
      %c0_11 = arith.constant 0 : index
      %12 = vector.load %arg8[%c0_10, %c0_11] : memref<128x128xf32, #tpu.memory_space<vmem>>, vector<128x128xf32>
      %c0_12 = arith.constant 0 : index
      %c0_13 = arith.constant 0 : index
      %13 = vector.load %arg5[%c0_12, %c0_13] : memref<1x128xf32, #tpu.memory_space<vmem>>, vector<1x128xf32>
      %14 = vector.broadcast %13 : vector<1x128xf32> to vector<128x128xf32>
      %15 = arith.addf %12, %14 : vector<128x128xf32>
      %cst_14 = arith.constant 1.000000e-01 : f32
      %16 = vector.broadcast %cst_14 : f32 to vector<128x128xf32>
      %17 = arith.mulf %16, %15 : vector<128x128xf32>
      %18 = arith.maximumf %15, %17 : vector<128x128xf32>
      %c0_15 = arith.constant 0 : index
      %c0_16 = arith.constant 0 : index
      %19 = vector.load %arg6[%c0_15, %c0_16] : memref<128x128xbf16, #tpu.memory_space<vmem>>, vector<128x128xbf16>
      %20 = arith.extf %19 : vector<128x128xbf16> to vector<128x128xf32>
      %21 = arith.addf %20, %18 : vector<128x128xf32>
      %22 = arith.truncf %21 : vector<128x128xf32> to vector<128x128xbf16>
      %c0_17 = arith.constant 0 : index
      %c0_18 = arith.constant 0 : index
      %23 = vector.load %arg7[%c0_17, %c0_18] : memref<128x128xbf16, #tpu.memory_space<vmem>>, vector<128x128xbf16>
      tpu.vector_store %arg7[%c0_17, %c0_18], %22 {strides = array<i32>} : memref<128x128xbf16, #tpu.memory_space<vmem>>, vector<128x128xbf16>,
    } else {
    }
    return
  }
  func.func @transform_0(%arg0: i32, %arg1: i32, %arg2: i32) -> (i32, i32) {
    %c0_i32 = arith.constant 0 : i32
    return %arg0, %arg2 : i32, i32
  }
  func.func @transform_1(%arg0: i32, %arg1: i32, %arg2: i32) -> (i32, i32) {
    %c0_i32 = arith.constant 0 : i32
    return %arg2, %arg1 : i32, i32
  }
  func.func @transform_2(%arg0: i32, %arg1: i32, %arg2: i32) -> (i32, i32) {
    %c0_i32 = arith.constant 0 : i32
    %c0_i32_0 = arith.constant 0 : i32
    return %c0_i32, %arg1 : i32, i32
  }
  func.func @transform_3(%arg0: i32, %arg1: i32, %arg2: i32) -> (i32, i32) {
    %c0_i32 = arith.constant 0 : i32
    return %arg0, %arg1 : i32, i32
  }
  func.func @transform_4(%arg0: i32, %arg1: i32, %arg2: i32) -> (i32, i32) {
    %c0_i32 = arith.constant 0 : i32
    return %arg0, %arg1 : i32, i32
  }
}

</mosaic_0001>

<llo_original>
// kernel: resblock_forward.5
$region0: #{resblock_forward.5}
  #allocation0 [shape = 'u32[]', space=smem, size = 0x4, offset = 0x4, fixed_abs, tag = 'smem constant byte address 0x4 - core index']
  #allocation1 [shape = 'u32[144,128]{1,0:T(1,128)}', space=vmem, size = 0x12000, scoped, tag = 'internal scratch']
  #allocation2 [shape = 'f32[128,128]{1,0:T(8,128)}', space=vmem, size = 0x10000, scoped, tag = 'scratch operand']
  %s0 = inlined_call_operand.vmem [shape: bf16[128,128], index: 0, kind: input, shape index: {}]
  %s1 = inlined_call_operand.vmem [shape: bf16[128,128], index: 1, kind: input, shape index: {}]
  %s2 = inlined_call_operand.vmem [shape: f32[1,128], index: 2, kind: input, shape index: {}]
  %s3 = inlined_call_operand.vmem [shape: bf16[128,128], index: 3, kind: output, shape index: {}]
  %s4 = sld [smem:[#allocation0]]
  $region30: #{resblock_forward.5} parent=0
    _
  %s6 = ssub.s32 1, %s4
  %s7 = scalar_select 0, %s6, %s4
  // Predicated region
  $region2: #{resblock_forward.5} parent=0 // pred_check
    _
  $region3: #{resblock_forward.5} parent=0 // pred_check_branch
    %9 = sbr.rel (0) target = $region5
  $region4: #{resblock_forward.5} parent=0 // pred_region
    _
  $region5: #{resblock_forward.5} parent=0 // pred_fallthru
    _
  // Predicated region
  $region6: #{resblock_forward.5} parent=0 // pred_check
    _
  $region7: #{resblock_forward.5} parent=0 // pred_check_branch
    %11 = sbr.rel (0) target = $region9
  $region8: #{resblock_forward.5} parent=0 // pred_region
    _
  $region9: #{resblock_forward.5} parent=0 // pred_fallthru
    _
  // Predicated region
  $region10: #{resblock_forward.5} parent=0 // pred_check
    _
  $region11: #{resblock_forward.5} parent=0 // pred_check_branch
    %13 = sbr.rel (0) target = $region13
  $region12: #{resblock_forward.5} parent=0 // pred_region
    _
  $region13: #{resblock_forward.5} parent=0 // pred_fallthru
    _
  %p15 = scmp.eq.s32.totalorder 0, 0
  // Predicated region
  $region14: #{resblock_forward.5} parent=0 // pred_check
    %p16 = pneg %p15
  $region15: #{resblock_forward.5} parent=0 // pred_check_branch
    %18 = sbr.rel (%p16) target = $region17
  $region16: #{resblock_forward.5} parent=0 // pred_region
    %19 = vst [vmem:[#allocation2] sm:$0xff] 0.0
    %20 = vst [vmem:[#allocation2 + $0x8] sm:$0xff] 0.0
    %21 = vst [vmem:[#allocation2 + $0x10] sm:$0xff] 0.0
    %22 = vst [vmem:[#allocation2 + $0x18] sm:$0xff] 0.0
    %23 = vst [vmem:[#allocation2 + $0x20] sm:$0xff] 0.0
    %24 = vst [vmem:[#allocation2 + $0x28] sm:$0xff] 0.0
    %25 = vst [vmem:[#allocation2 + $0x30] sm:$0xff] 0.0
    %26 = vst [vmem:[#allocation2 + $0x38] sm:$0xff] 0.0
    %27 = vst [vmem:[#allocation2 + $0x40] sm:$0xff] 0.0
    %28 = vst [vmem:[#allocation2 + $0x48] sm:$0xff] 0.0
    %29 = vst [vmem:[#allocation2 + $0x50] sm:$0xff] 0.0
    %30 = vst [vmem:[#allocation2 + $0x58] sm:$0xff] 0.0
    %31 = vst [vmem:[#allocation2 + $0x60] sm:$0xff] 0.0
    %32 = vst [vmem:[#allocation2 + $0x68] sm:$0xff] 0.0
    %33 = vst [vmem:[#allocation2 + $0x70] sm:$0xff] 0.0
    %34 = vst [vmem:[#allocation2 + $0x78] sm:$0xff] 0.0
  $region17: #{resblock_forward.5} parent=0 // pred_fallthru
    _
  %v35 = vld [vmem:[#allocation2] sm:$0xff]
  %v36 = vld [vmem:[#allocation2 + $0x8] sm:$0xff]
  %v37 = vld [vmem:[#allocation2 + $0x10] sm:$0xff]
  %v38 = vld [vmem:[#allocation2 + $0x18] sm:$0xff]
  %v39 = vld [vmem:[#allocation2 + $0x20] sm:$0xff]
  %v40 = vld [vmem:[#allocation2 + $0x28] sm:$0xff]
  %v41 = vld [vmem:[#allocation2 + $0x30] sm:$0xff]
  %v42 = vld [vmem:[#allocation2 + $0x38] sm:$0xff]
  %v43 = vld [vmem:[#allocation2 + $0x40] sm:$0xff]
  %v44 = vld [vmem:[#allocation2 + $0x48] sm:$0xff]
  %v45 = vld [vmem:[#allocation2 + $0x50] sm:$0xff]
  %v46 = vld [vmem:[#allocation2 + $0x58] sm:$0xff]
  %v47 = vld [vmem:[#allocation2 + $0x60] sm:$0xff]
  %v48 = vld [vmem:[#allocation2 + $0x68] sm:$0xff]
  %v49 = vld [vmem:[#allocation2 + $0x70] sm:$0xff]
  %v50 = vld [vmem:[#allocation2 + $0x78] sm:$0xff]
  %v51 = vld [vmem:[%s0] sm:$0xf]
  %v52 = vld [vmem:[%s0 + $0x4] sm:$0xf]
  %v53 = vld [vmem:[%s0 + $0x8] sm:$0xf]
  %v54 = vld [vmem:[%s0 + $0xc] sm:$0xf]
  %v55 = vld [vmem:[%s0 + $0x10] sm:$0xf]
  %v56 = vld [vmem:[%s0 + $0x14] sm:$0xf]
  %v57 = vld [vmem:[%s0 + $0x18] sm:$0xf]
  %v58 = vld [vmem:[%s0 + $0x1c] sm:$0xf]
  %v59 = vld [vmem:[%s0 + $0x20] sm:$0xf]
  %v60 = vld [vmem:[%s0 + $0x24] sm:$0xf]
  %v61 = vld [vmem:[%s0 + $0x28] sm:$0xf]
  %v62 = vld [vmem:[%s0 + $0x2c] sm:$0xf]
  %v63 = vld [vmem:[%s0 + $0x30] sm:$0xf]
  %v64 = vld [vmem:[%s0 + $0x34] sm:$0xf]
  %v65 = vld [vmem:[%s0 + $0x38] sm:$0xf]
  %v66 = vld [vmem:[%s0 + $0x3c] sm:$0xf]
  %v67 = vld [vmem:[%s1] sm:$0xf]
  %v68 = vld [vmem:[%s1 + $0x4] sm:$0xf]
  %v69 = vld [vmem:[%s1 + $0x8] sm:$0xf]
  %v70 = vld [vmem:[%s1 + $0xc] sm:$0xf]
  %v71 = vld [vmem:[%s1 + $0x10] sm:$0xf]
  %v72 = vld [vmem:[%s1 + $0x14] sm:$0xf]
  %v73 = vld [vmem:[%s1 + $0x18] sm:$0xf]
  %v74 = vld [vmem:[%s1 + $0x1c] sm:$0xf]
  %v75 = vld [vmem:[%s1 + $0x20] sm:$0xf]
  %v76 = vld [vmem:[%s1 + $0x24] sm:$0xf]
  %v77 = vld [vmem:[%s1 + $0x28] sm:$0xf]
  %v78 = vld [vmem:[%s1 + $0x2c] sm:$0xf]
  %v79 = vld [vmem:[%s1 + $0x30] sm:$0xf]
  %v80 = vld [vmem:[%s1 + $0x34] sm:$0xf]
  %v81 = vld [vmem:[%s1 + $0x38] sm:$0xf]
  %v82 = vld [vmem:[%s1 + $0x3c] sm:$0xf]
  %v99 = vunpack.c.l.b16 %v51
  %v100 = vunpack.c.l.b16 %v52
  %v101 = vunpack.c.l.b16 %v53
  %v102 = vunpack.c.l.b16 %v54
  %v103 = vunpack.c.l.b16 %v55
  %v104 = vunpack.c.l.b16 %v56
  %v105 = vunpack.c.l.b16 %v57
  %v106 = vunpack.c.l.b16 %v58
  %v107 = vunpack.c.l.b16 %v59
  %v108 = vunpack.c.l.b16 %v60
  %v109 = vunpack.c.l.b16 %v61
  %v110 = vunpack.c.l.b16 %v62
  %v111 = vunpack.c.l.b16 %v63
  %v112 = vunpack.c.l.b16 %v64
  %v113 = vunpack.c.l.b16 %v65
  %v114 = vunpack.c.l.b16 %v66
  %v115 = vpack.c.b16 %v100, %v99
  %v116 = vpack.c.b16 %v102, %v101
  %v117 = vpack.c.b16 %v104, %v103
  %v118 = vpack.c.b16 %v106, %v105
  %v119 = vpack.c.b16 %v108, %v107
  %v120 = vpack.c.b16 %v110, %v109
  %v121 = vpack.c.b16 %v112, %v111
  %v122 = vpack.c.b16 %v114, %v113
  %v147 = vunpack.c.l.b16 %v67
  %v148 = vunpack.c.l.b16 %v68
  %v149 = vunpack.c.l.b16 %v69
  %v150 = vunpack.c.l.b16 %v70
  %v151 = vunpack.c.l.b16 %v71
  %v152 = vunpack.c.l.b16 %v72
  %v153 = vunpack.c.l.b16 %v73
  %v154 = vunpack.c.l.b16 %v74
  %v155 = vunpack.c.l.b16 %v75
  %v156 = vunpack.c.l.b16 %v76
  %v157 = vunpack.c.l.b16 %v77
  %v158 = vunpack.c.l.b16 %v78
  %v159 = vunpack.c.l.b16 %v79
  %v160 = vunpack.c.l.b16 %v80
  %v161 = vunpack.c.l.b16 %v81
  %v162 = vunpack.c.l.b16 %v82
  %v163 = vpack.c.b16 %v148, %v147
  %v164 = vpack.c.b16 %v150, %v149
  %v165 = vpack.c.b16 %v152, %v151
  %v166 = vpack.c.b16 %v154, %v153
  %v167 = vpack.c.b16 %v156, %v155
  %v168 = vpack.c.b16 %v158, %v157
  %v169 = vpack.c.b16 %v160, %v159
  %v170 = vpack.c.b16 %v162, %v161
  %179 = vmatprep.subr.bf16.mxu0 0
  %180 = vmatpush1.bf16.msra.mxu0 %v163
  %181 = vmatprep.subr.bf16.mxu0 0
  %182 = vmatpush1.bf16.msra.mxu0 %v164
  %183 = vmatprep.subr.bf16.mxu0 0
  %184 = vmatpush1.bf16.msra.mxu0 %v165
  %185 = vmatprep.subr.bf16.mxu0 0
  %186 = vmatpush1.bf16.msra.mxu0 %v166
  %187 = vmatprep.subr.bf16.mxu0 0
  %188 = vmatpush1.bf16.msra.mxu0 %v167
  %189 = vmatprep.subr.bf16.mxu0 0
  %190 = vmatpush1.bf16.msra.mxu0 %v168
  %191 = vmatprep.subr.bf16.mxu0 0
  %192 = vmatpush1.bf16.msra.mxu0 %v169
  %193 = vmatprep.subr.bf16.mxu0 0
  %194 = vmatpush1.bf16.msra.mxu0 %v170
  %195 = vmatprep.subr.bf16.mxu0 0
  %196 = vmatpush1.bf16.msra.mxu0 0
  %197 = vmatprep.subr.bf16.mxu0 0
  %198 = vmatpush1.bf16.msra.mxu0 0
  %199 = vmatprep.subr.bf16.mxu0 0
  %200 = vmatpush1.bf16.msra.mxu0 0
  %201 = vmatprep.subr.bf16.mxu0 0
  %202 = vmatpush1.bf16.msra.mxu0 0
  %203 = vmatprep.subr.bf16.mxu0 0
  %204 = vmatpush1.bf16.msra.mxu0 0
  %205 = vmatprep.subr.bf16.mxu0 0
  %206 = vmatpush1.bf16.msra.mxu0 0
  %207 = vmatprep.subr.bf16.mxu0 0
  %208 = vmatpush1.bf16.msra.mxu0 0
  %209 = vmatprep.subr.bf16.mxu0 0
  %210 = vmatpush1.bf16.msra.mxu0 0
  %211 = vmatprep.mubr.bf16.mxu0 0
  %212 = vmatmul.mubr.bf16.gmra.mrb[0].mxu0 %v115
  %v213 = vpop.f32.mrb[0].mxu0
  %v214 = vadd.f32 0.0, %v213
  %v215 = vpop.f32.mrb[0].mxu0
  %v216 = vpop.f32.mrb[0].mxu0
  %v217 = vadd.f32 0.0, %v216
  %v218 = vpop.f32.mrb[0].mxu0
  %219 = vmatprep.mubr.bf16.mxu0 0
  %220 = vmatmul.mubr.bf16.gmra.mrb[0].mxu0 %v116
  %v221 = vpop.f32.mrb[0].mxu0
  %v222 = vadd.f32 0.0, %v221
  %v223 = vpop.f32.mrb[0].mxu0
  %v224 = vpop.f32.mrb[0].mxu0
  %v225 = vadd.f32 0.0, %v224
  %v226 = vpop.f32.mrb[0].mxu0
  %227 = vmatprep.mubr.bf16.mxu0 0
  %228 = vmatmul.mubr.bf16.gmra.mrb[0].mxu0 %v117
  %v229 = vpop.f32.mrb[0].mxu0
  %v230 = vadd.f32 0.0, %v229
  %v231 = vpop.f32.mrb[0].mxu0
  %v232 = vpop.f32.mrb[0].mxu0
  %v233 = vadd.f32 0.0, %v232
  %v234 = vpop.f32.mrb[0].mxu0
  %235 = vmatprep.mubr.bf16.mxu0 0
  %236 = vmatmul.mubr.bf16.gmra.mrb[0].mxu0 %v118
  %v237 = vpop.f32.mrb[0].mxu0
  %v238 = vadd.f32 0.0, %v237
  %v239 = vpop.f32.mrb[0].mxu0
  %v240 = vpop.f32.mrb[0].mxu0
  %v241 = vadd.f32 0.0, %v240
  %v242 = vpop.f32.mrb[0].mxu0
  %243 = vmatprep.mubr.bf16.mxu0 0
  %244 = vmatmul.mubr.bf16.gmra.mrb[0].mxu0 %v119
  %v245 = vpop.f32.mrb[0].mxu0
  %v246 = vadd.f32 0.0, %v245
  %v247 = vpop.f32.mrb[0].mxu0
  %v248 = vpop.f32.mrb[0].mxu0
  %v249 = vadd.f32 0.0, %v248
  %v250 = vpop.f32.mrb[0].mxu0
  %251 = vmatprep.mubr.bf16.mxu0 0
  %252 = vmatmul.mubr.bf16.gmra.mrb[0].mxu0 %v120
  %v253 = vpop.f32.mrb[0].mxu0
  %v254 = vadd.f32 0.0, %v253
  %v255 = vpop.f32.mrb[0].mxu0
  %v256 = vpop.f32.mrb[0].mxu0
  %v257 = vadd.f32 0.0, %v256
  %v258 = vpop.f32.mrb[0].mxu0
  %259 = vmatprep.mubr.bf16.mxu0 0
  %260 = vmatmul.mubr.bf16.gmra.mrb[0].mxu0 %v121
  %v261 = vpop.f32.mrb[0].mxu0
  %v262 = vadd.f32 0.0, %v261
  %v263 = vpop.f32.mrb[0].mxu0
  %v264 = vpop.f32.mrb[0].mxu0
  %v265 = vadd.f32 0.0, %v264
  %v266 = vpop.f32.mrb[0].mxu0
  %267 = vmatprep.mubr.bf16.mxu0 0
  %268 = vmatmul.mubr.bf16.gmra.mrb[0].mxu0 %v122
  %v269 = vpop.f32.mrb[0].mxu0
  %v270 = vadd.f32 0.0, %v269
  %v271 = vpop.f32.mrb[0].mxu0
  %v272 = vpop.f32.mrb[0].mxu0
  %v273 = vadd.f32 0.0, %v272
  %v274 = vpop.f32.mrb[0].mxu0
  %275 = vdwg.mxu0
  %v276 = vadd.f32 %v35, %v214
  %v277 = vadd.f32 %v36, %v217
  %v278 = vadd.f32 %v37, %v222
  %v279 = vadd.f32 %v38, %v225
  %v280 = vadd.f32 %v39, %v230
  %v281 = vadd.f32 %v40, %v233
  %v282 = vadd.f32 %v41, %v238
  %v283 = vadd.f32 %v42, %v241
  %v284 = vadd.f32 %v43, %v246
  %v285 = vadd.f32 %v44, %v249
  %v286 = vadd.f32 %v45, %v254
  %v287 = vadd.f32 %v46, %v257
  %v288 = vadd.f32 %v47, %v262
  %v289 = vadd.f32 %v48, %v265
  %v290 = vadd.f32 %v49, %v270
  %v291 = vadd.f32 %v50, %v273
  %292 = vst [vmem:[#allocation2] sm:$0xff] %v276
  %293 = vst [vmem:[#allocation2 + $0x8] sm:$0xff] %v277
  %294 = vst [vmem:[#allocation2 + $0x10] sm:$0xff] %v278
  %295 = vst [vmem:[#allocation2 + $0x18] sm:$0xff] %v279
  %296 = vst [vmem:[#allocation2 + $0x20] sm:$0xff] %v280
  %297 = vst [vmem:[#allocation2 + $0x28] sm:$0xff] %v281
  %298 = vst [vmem:[#allocation2 + $0x30] sm:$0xff] %v282
  %299 = vst [vmem:[#allocation2 + $0x38] sm:$0xff] %v283
  %300 = vst [vmem:[#allocation2 + $0x40] sm:$0xff] %v284
  %301 = vst [vmem:[#allocation2 + $0x48] sm:$0xff] %v285
  %302 = vst [vmem:[#allocation2 + $0x50] sm:$0xff] %v286
  %303 = vst [vmem:[#allocation2 + $0x58] sm:$0xff] %v287
  %304 = vst [vmem:[#allocation2 + $0x60] sm:$0xff] %v288
  %305 = vst [vmem:[#allocation2 + $0x68] sm:$0xff] %v289
  %306 = vst [vmem:[#allocation2 + $0x70] sm:$0xff] %v290
  %307 = vst [vmem:[#allocation2 + $0x78] sm:$0xff] %v291
  // Predicated region
  $region18: #{resblock_forward.5} parent=0 // pred_check
    %p308 = pneg %p15
  $region19: #{resblock_forward.5} parent=0 // pred_check_branch
    %310 = sbr.rel (%p308) target = $region21
  $region20: #{resblock_forward.5} parent=0 // pred_region
    %v311 = vld [vmem:[#allocation2] sm:$0xff]
    %v312 = vld [vmem:[#allocation2 + $0x8] sm:$0xff]
    %v313 = vld [vmem:[#allocation2 + $0x10] sm:$0xff]
    %v314 = vld [vmem:[#allocation2 + $0x18] sm:$0xff]
    %v315 = vld [vmem:[#allocation2 + $0x20] sm:$0xff]
    %v316 = vld [vmem:[#allocation2 + $0x28] sm:$0xff]
    %v317 = vld [vmem:[#allocation2 + $0x30] sm:$0xff]
    %v318 = vld [vmem:[#allocation2 + $0x38] sm:$0xff]
    %v319 = vld [vmem:[#allocation2 + $0x40] sm:$0xff]
    %v320 = vld [vmem:[#allocation2 + $0x48] sm:$0xff]
    %v321 = vld [vmem:[#allocation2 + $0x50] sm:$0xff]
    %v322 = vld [vmem:[#allocation2 + $0x58] sm:$0xff]
    %v323 = vld [vmem:[#allocation2 + $0x60] sm:$0xff]
    %v324 = vld [vmem:[#allocation2 + $0x68] sm:$0xff]
    %v325 = vld [vmem:[#allocation2 + $0x70] sm:$0xff]
    %v326 = vld [vmem:[#allocation2 + $0x78] sm:$0xff]
    %v327 = vld [vmem:[%s2] sm:$0x1]
    %v329 = vlaneseq
    %v330 = vshrl.u32 %v329, 7
    %v331 = vsub.s32 0, %v330
    %v332 = vrot.slane %v327, %v331
    %v334 = vadd.f32 %v311, %v332
    %v335 = vadd.f32 %v312, %v332
    %v336 = vadd.f32 %v313, %v332
    %v337 = vadd.f32 %v314, %v332
    %v338 = vadd.f32 %v315, %v332
    %v339 = vadd.f32 %v316, %v332
    %v340 = vadd.f32 %v317, %v332
    %v341 = vadd.f32 %v318, %v332
    %v342 = vadd.f32 %v319, %v332
    %v343 = vadd.f32 %v320, %v332
    %v344 = vadd.f32 %v321, %v332
    %v345 = vadd.f32 %v322, %v332
    %v346 = vadd.f32 %v323, %v332
    %v347 = vadd.f32 %v324, %v332
    %v348 = vadd.f32 %v325, %v332
    %v349 = vadd.f32 %v326, %v332
    %v350 = vmul.f32 %v334, 0.1
    %v351 = vmul.f32 %v335, 0.1
    %v352 = vmul.f32 %v336, 0.1
    %v353 = vmul.f32 %v337, 0.1
    %v354 = vmul.f32 %v338, 0.1
    %v355 = vmul.f32 %v339, 0.1
    %v356 = vmul.f32 %v340, 0.1
    %v357 = vmul.f32 %v341, 0.1
    %v358 = vmul.f32 %v342, 0.1
    %v359 = vmul.f32 %v343, 0.1
    %v360 = vmul.f32 %v344, 0.1
    %v361 = vmul.f32 %v345, 0.1
    %v362 = vmul.f32 %v346, 0.1
    %v363 = vmul.f32 %v347, 0.1
    %v364 = vmul.f32 %v348, 0.1
    %v365 = vmul.f32 %v349, 0.1
    %v366 = vmax.f32 %v334, %v350
    %v367 = vmax.f32 %v335, %v351
    %v368 = vmax.f32 %v336, %v352
    %v369 = vmax.f32 %v337, %v353
    %v370 = vmax.f32 %v338, %v354
    %v371 = vmax.f32 %v339, %v355
    %v372 = vmax.f32 %v340, %v356
    %v373 = vmax.f32 %v341, %v357
    %v374 = vmax.f32 %v342, %v358
    %v375 = vmax.f32 %v343, %v359
    %v376 = vmax.f32 %v344, %v360
    %v377 = vmax.f32 %v345, %v361
    %v378 = vmax.f32 %v346, %v362
    %v379 = vmax.f32 %v347, %v363
    %v380 = vmax.f32 %v348, %v364
    %v381 = vmax.f32 %v349, %v365
    %v382 = vpack.c.bf16 %v367, %v366
    %v383 = vpack.c.bf16 %v369, %v368
    %v384 = vpack.c.bf16 %v371, %v370
    %v385 = vpack.c.bf16 %v373, %v372
    %v386 = vpack.c.bf16 %v375, %v374
    %v387 = vpack.c.bf16 %v377, %v376
    %v388 = vpack.c.bf16 %v379, %v378
    %v389 = vpack.c.bf16 %v381, %v380
    %v398 = vunpack.c.l.b16 %v382
    %v399 = vunpack.c.h.b16 %v382
    %v400 = vunpack.c.l.b16 %v383
    %v401 = vunpack.c.h.b16 %v383
    %v402 = vunpack.c.l.b16 %v384
    %v403 = vunpack.c.h.b16 %v384
    %v404 = vunpack.c.l.b16 %v385
    %v405 = vunpack.c.h.b16 %v385
    %v406 = vunpack.c.l.b16 %v386
    %v407 = vunpack.c.h.b16 %v386
    %v408 = vunpack.c.l.b16 %v387
    %v409 = vunpack.c.h.b16 %v387
    %v410 = vunpack.c.l.b16 %v388
    %v411 = vunpack.c.h.b16 %v388
    %v412 = vunpack.c.l.b16 %v389
    %v413 = vunpack.c.h.b16 %v389
    %v414 = vpack.c.b16 %v398, %v398
    %v415 = vpack.c.b16 %v399, %v399
    %v416 = vpack.c.b16 %v400, %v400
    %v417 = vpack.c.b16 %v401, %v401
    %v418 = vpack.c.b16 %v402, %v402
    %v419 = vpack.c.b16 %v403, %v403
    %v420 = vpack.c.b16 %v404, %v404
    %v421 = vpack.c.b16 %v405, %v405
    %v422 = vpack.c.b16 %v406, %v406
    %v423 = vpack.c.b16 %v407, %v407
    %v424 = vpack.c.b16 %v408, %v408
    %v425 = vpack.c.b16 %v409, %v409
    %v426 = vpack.c.b16 %v410, %v410
    %v427 = vpack.c.b16 %v411, %v411
    %v428 = vpack.c.b16 %v412, %v412
    %v429 = vpack.c.b16 %v413, %v413
    %446 = vst [vmem:[%s3] sm:$0xf] %v414
    %447 = vst [vmem:[%s3 + $0x4] sm:$0xf] %v415
    %448 = vst [vmem:[%s3 + $0x8] sm:$0xf] %v416
    %449 = vst [vmem:[%s3 + $0xc] sm:$0xf] %v417
    %450 = vst [vmem:[%s3 + $0x10] sm:$0xf] %v418
    %451 = vst [vmem:[%s3 + $0x14] sm:$0xf] %v419
    %452 = vst [vmem:[%s3 + $0x18] sm:$0xf] %v420
    %453 = vst [vmem:[%s3 + $0x1c] sm:$0xf] %v421
    %454 = vst [vmem:[%s3 + $0x20] sm:$0xf] %v422
    %455 = vst [vmem:[%s3 + $0x24] sm:$0xf] %v423
    %456 = vst [vmem:[%s3 + $0x28] sm:$0xf] %v424
    %457 = vst [vmem:[%s3 + $0x2c] sm:$0xf] %v425
    %458 = vst [vmem:[%s3 + $0x30] sm:$0xf] %v426
    %459 = vst [vmem:[%s3 + $0x34] sm:$0xf] %v427
    %460 = vst [vmem:[%s3 + $0x38] sm:$0xf] %v428
    %461 = vst [vmem:[%s3 + $0x3c] sm:$0xf] %v429
  $region21: #{resblock_forward.5} parent=0 // pred_fallthru
    _
  // Predicated region
  $region22: #{resblock_forward.5} parent=0 // pred_check
    _
  $region23: #{resblock_forward.5} parent=0 // pred_check_branch
    %463 = sbr.rel (0) target = $region25
  $region24: #{resblock_forward.5} parent=0 // pred_region
    _
  $region25: #{resblock_forward.5} parent=0 // pred_fallthru
    _
  // Predicated region
  $region26: #{resblock_forward.5} parent=0 // pred_check
    _
  $region27: #{resblock_forward.5} parent=0 // pred_check_branch
    %465 = sbr.rel (0) target = $region29
  $region28: #{resblock_forward.5} parent=0 // pred_region
    _
  $region29: #{resblock_forward.5} parent=0 // pred_fallthru
    _

// kernel: resblock_forward.7
$region0: #{resblock_forward.7}
  #allocation0 [shape = 'u32[]', space=smem, size = 0x4, offset = 0x4, fixed_abs, tag = 'smem constant byte address 0x4 - core index']
  #allocation1 [shape = 'u32[144,128]{1,0:T(1,128)}', space=vmem, size = 0x12000, scoped, tag = 'internal scratch']
  #allocation2 [shape = 'f32[128,128]{1,0:T(8,128)}', space=vmem, size = 0x10000, scoped, tag = 'scratch operand']
  %s0 = inlined_call_operand.vmem [shape: bf16[128,1152], index: 0, kind: input, shape index: {}]
  %s1 = inlined_call_operand.vmem [shape: bf16[1152,128], index: 1, kind: input, shape index: {}]
  %s2 = inlined_call_operand.vmem [shape: f32[1,128], index: 2, kind: input, shape index: {}]
  %s3 = inlined_call_operand.vmem [shape: bf16[128,128], index: 3, kind: input, shape index: {}, may-alias: {3,4}]
  %s4 = inlined_call_operand.vmem [shape: bf16[128,128], index: 4, kind: output, shape index: {}, may-alias: {3,4}]
  %s5 = sld [smem:[#allocation0]]
  $region34: #{resblock_forward.7} parent=0
    _
  %s7 = ssub.s32 1, %s5
  %s8 = scalar_select 0, %s7, %s5
  // Predicated region
  $region2: #{resblock_forward.7} parent=0 // pred_check
    _
  $region3: #{resblock_forward.7} parent=0 // pred_check_branch
    %10 = sbr.rel (0) target = $region5
  $region4: #{resblock_forward.7} parent=0 // pred_region
    _
  $region5: #{resblock_forward.7} parent=0 // pred_fallthru
    _
  // Predicated region
  $region6: #{resblock_forward.7} parent=0 // pred_check
    _
  $region7: #{resblock_forward.7} parent=0 // pred_check_branch
    %12 = sbr.rel (0) target = $region9
  $region8: #{resblock_forward.7} parent=0 // pred_region
    _
  $region9: #{resblock_forward.7} parent=0 // pred_fallthru
    _
  // Predicated region
  $region10: #{resblock_forward.7} parent=0 // pred_check
    _
  $region11: #{resblock_forward.7} parent=0 // pred_check_branch
    %14 = sbr.rel (0) target = $region13
  $region12: #{resblock_forward.7} parent=0 // pred_region
    _
  $region13: #{resblock_forward.7} parent=0 // pred_fallthru
    _
  // Predicated region
  $region14: #{resblock_forward.7} parent=0 // pred_check
    _
  $region15: #{resblock_forward.7} parent=0 // pred_check_branch
    %16 = sbr.rel (0) target = $region17
  $region16: #{resblock_forward.7} parent=0 // pred_region
    _
  $region17: #{resblock_forward.7} parent=0 // pred_fallthru
    _
  %p18 = scmp.eq.s32.totalorder 0, 0
  // Predicated region
  $region18: #{resblock_forward.7} parent=0 // pred_check
    %p19 = pneg %p18
  $region19: #{resblock_forward.7} parent=0 // pred_check_branch
    %21 = sbr.rel (%p19) target = $region21
  $region20: #{resblock_forward.7} parent=0 // pred_region
    %22 = vst [vmem:[#allocation2] sm:$0xff] 0.0
    %23 = vst [vmem:[#allocation2 + $0x8] sm:$0xff] 0.0
    %24 = vst [vmem:[#allocation2 + $0x10] sm:$0xff] 0.0
    %25 = vst [vmem:[#allocation2 + $0x18] sm:$0xff] 0.0
    %26 = vst [vmem:[#allocation2 + $0x20] sm:$0xff] 0.0
    %27 = vst [vmem:[#allocation2 + $0x28] sm:$0xff] 0.0
    %28 = vst [vmem:[#allocation2 + $0x30] sm:$0xff] 0.0
    %29 = vst [vmem:[#allocation2 + $0x38] sm:$0xff] 0.0
    %30 = vst [vmem:[#allocation2 + $0x40] sm:$0xff] 0.0
    %31 = vst [vmem:[#allocation2 + $0x48] sm:$0xff] 0.0
    %32 = vst [vmem:[#allocation2 + $0x50] sm:$0xff] 0.0
    %33 = vst [vmem:[#allocation2 + $0x58] sm:$0xff] 0.0
    %34 = vst [vmem:[#allocation2 + $0x60] sm:$0xff] 0.0
    %35 = vst [vmem:[#allocation2 + $0x68] sm:$0xff] 0.0
    %36 = vst [vmem:[#allocation2 + $0x70] sm:$0xff] 0.0
    %37 = vst [vmem:[#allocation2 + $0x78] sm:$0xff] 0.0
  $region21: #{resblock_forward.7} parent=0 // pred_fallthru
    _
  %v38 = vld [vmem:[#allocation2] sm:$0xff]
  %v39 = vld [vmem:[#allocation2 + $0x8] sm:$0xff]
  %v40 = vld [vmem:[#allocation2 + $0x10] sm:$0xff]
  %v41 = vld [vmem:[#allocation2 + $0x18] sm:$0xff]
  %v42 = vld [vmem:[#allocation2 + $0x20] sm:$0xff]
  %v43 = vld [vmem:[#allocation2 + $0x28] sm:$0xff]
  %v44 = vld [vmem:[#allocation2 + $0x30] sm:$0xff]
  %v45 = vld [vmem:[#allocation2 + $0x38] sm:$0xff]
  %v46 = vld [vmem:[#allocation2 + $0x40] sm:$0xff]
  %v47 = vld [vmem:[#allocation2 + $0x48] sm:$0xff]
  %v48 = vld [vmem:[#allocation2 + $0x50] sm:$0xff]
  %v49 = vld [vmem:[#allocation2 + $0x58] sm:$0xff]
  %v50 = vld [vmem:[#allocation2 + $0x60] sm:$0xff]
  %v51 = vld [vmem:[#allocation2 + $0x68] sm:$0xff]
  %v52 = vld [vmem:[#allocation2 + $0x70] sm:$0xff]
  %v53 = vld [vmem:[#allocation2 + $0x78] sm:$0xff]
  %v54 = vld [vmem:[%s0] sm:$0xff]
  %v55 = vld [vmem:[%s0 + $0x8] sm:$0xff]
  %v56 = vld [vmem:[%s0 + $0x10] sm:$0xff]
  %v57 = vld [vmem:[%s0 + $0x18] sm:$0xff]
  %v58 = vld [vmem:[%s0 + $0x20] sm:$0xf]
  %v59 = vld [vmem:[%s0 + $0x24] sm:$0xff]
  %v60 = vld [vmem:[%s0 + $0x2c] sm:$0xff]
  %v61 = vld [vmem:[%s0 + $0x34] sm:$0xff]
  %v62 = vld [vmem:[%s0 + $0x3c] sm:$0xff]
  %v63 = vld [vmem:[%s0 + $0x44] sm:$0xf]
  %v64 = vld [vmem:[%s0 + $0x48] sm:$0xff]
  %v65 = vld [vmem:[%s0 + $0x50] sm:$0xff]
  %v66 = vld [vmem:[%s0 + $0x58] sm:$0xff]
  %v67 = vld [vmem:[%s0 + $0x60] sm:$0xff]
  %v68 = vld [vmem:[%s0 + $0x68] sm:$0xf]
  %v69 = vld [vmem:[%s0 + $0x6c] sm:$0xff]
  %v70 = vld [vmem:[%s0 + $0x74] sm:$0xff]
  %v71 = vld [vmem:[%s0 + $0x7c] sm:$0xff]
  %v72 = vld [vmem:[%s0 + $0x84] sm:$0xff]
  %v73 = vld [vmem:[%s0 + $0x8c] sm:$0xf]
  %v74 = vld [vmem:[%s0 + $0x90] sm:$0xff]
  %v75 = vld [vmem:[%s0 + $0x98] sm:$0xff]
  %v76 = vld [vmem:[%s0 + $0xa0] sm:$0xff]
  %v77 = vld [vmem:[%s0 + $0xa8] sm:$0xff]
  %v78 = vld [vmem:[%s0 + $0xb0] sm:$0xf]
  %v79 = vld [vmem:[%s0 + $0xb4] sm:$0xff]
  %v80 = vld [vmem:[%s0 + $0xbc] sm:$0xff]
  %v81 = vld [vmem:[%s0 + $0xc4] sm:$0xff]
  %v82 = vld [vmem:[%s0 + $0xcc] sm:$0xff]
  %v83 = vld [vmem:[%s0 + $0xd4] sm:$0xf]
  %v84 = vld [vmem:[%s0 + $0xd8] sm:$0xff]
  %v85 = vld [vmem:[%s0 + $0xe0] sm:$0xff]
  %v86 = vld [vmem:[%s0 + $0xe8] sm:$0xff]
  %v87 = vld [vmem:[%s0 + $0xf0] sm:$0xff]
  %v88 = vld [vmem:[%s0 + $0xf8] sm:$0xf]
  %v89 = vld [vmem:[%s0 + $0xfc] sm:$0xff]
  %v90 = vld [vmem:[%s0 + $0x104] sm:$0xff]
  %v91 = vld [vmem:[%s0 + $0x10c] sm:$0xff]
  %v92 = vld [vmem:[%s0 + $0x114] sm:$0xff]
  %v93 = vld [vmem:[%s0 + $0x11c] sm:$0xf]
  %v94 = vld [vmem:[%s0 + $0x120] sm:$0xff]
  %v95 = vld [vmem:[%s0 + $0x128] sm:$0xff]
  %v96 = vld [vmem:[%s0 + $0x130] sm:$0xff]
  %v97 = vld [vmem:[%s0 + $0x138] sm:$0xff]
  %v98 = vld [vmem:[%s0 + $0x140] sm:$0xf]
  %v99 = vld [vmem:[%s0 + $0x144] sm:$0xff]
  %v100 = vld [vmem:[%s0 + $0x14c] sm:$0xff]
  %v101 = vld [vmem:[%s0 + $0x154] sm:$0xff]
  %v102 = vld [vmem:[%s0 + $0x15c] sm:$0xff]
  %v103 = vld [vmem:[%s0 + $0x164] sm:$0xf]
  %v104 = vld [vmem:[%s0 + $0x168] sm:$0xff]
  %v105 = vld [vmem:[%s0 + $0x170] sm:$0xff]
  %v106 = vld [vmem:[%s0 + $0x178] sm:$0xff]
  %v107 = vld [vmem:[%s0 + $0x180] sm:$0xff]
  %v108 = vld [vmem:[%s0 + $0x188] sm:$0xf]
  %v109 = vld [vmem:[%s0 + $0x18c] sm:$0xff]
  %v110 = vld [vmem:[%s0 + $0x194] sm:$0xff]
  %v111 = vld [vmem:[%s0 + $0x19c] sm:$0xff]
  %v112 = vld [vmem:[%s0 + $0x1a4] sm:$0xff]
  %v113 = vld [vmem:[%s0 + $0x1ac] sm:$0xf]
  %v114 = vld [vmem:[%s0 + $0x1b0] sm:$0xff]
  %v115 = vld [vmem:[%s0 + $0x1b8] sm:$0xff]
  %v116 = vld [vmem:[%s0 + $0x1c0] sm:$0xff]
  %v117 = vld [vmem:[%s0 + $0x1c8] sm:$0xff]
  %v118 = vld [vmem:[%s0 + $0x1d0] sm:$0xf]
  %v119 = vld [vmem:[%s0 + $0x1d4] sm:$0xff]
  %v120 = vld [vmem:[%s0 + $0x1dc] sm:$0xff]
  %v121 = vld [vmem:[%s0 + $0x1e4] sm:$0xff]
  %v122 = vld [vmem:[%s0 + $0x1ec] sm:$0xff]
  %v123 = vld [vmem:[%s0 + $0x1f4] sm:$0xf]
  %v124 = vld [vmem:[%s0 + $0x1f8] sm:$0xff]
  %v125 = vld [vmem:[%s0 + $0x200] sm:$0xff]
  %v126 = vld [vmem:[%s0 + $0x208] sm:$0xff]
  %v127 = vld [vmem:[%s0 + $0x210] sm:$0xff]
  %v128 = vld [vmem:[%s0 + $0x218] sm:$0xf]
  %v129 = vld [vmem:[%s0 + $0x21c] sm:$0xff]
  %v130 = vld [vmem:[%s0 + $0x224] sm:$0xff]
  %v131 = vld [vmem:[%s0 + $0x22c] sm:$0xff]
  %v132 = vld [vmem:[%s0 + $0x234] sm:$0xff]
  %v133 = vld [vmem:[%s0 + $0x23c] sm:$0xf]
  %v134 = vld [vmem:[%s1] sm:$0xf]
  %v135 = vld [vmem:[%s1 + $0x4] sm:$0xf]
  %v136 = vld [vmem:[%s1 + $0x8] sm:$0xf]
  %v137 = vld [vmem:[%s1 + $0xc] sm:$0xf]
  %v138 = vld [vmem:[%s1 + $0x10] sm:$0xf]
  %v139 = vld [vmem:[%s1 + $0x14] sm:$0xf]
  %v140 = vld [vmem:[%s1 + $0x18] sm:$0xf]
  %v141 = vld [vmem:[%s1 + $0x1c] sm:$0xf]
  %v142 = vld [vmem:[%s1 + $0x20] sm:$0xf]
  %v143 = vld [vmem:[%s1 + $0x24] sm:$0xf]
  %v144 = vld [vmem:[%s1 + $0x28] sm:$0xf]
  %v145 = vld [vmem:[%s1 + $0x2c] sm:$0xf]
  %v146 = vld [vmem:[%s1 + $0x30] sm:$0xf]
  %v147 = vld [vmem:[%s1 + $0x34] sm:$0xf]
  %v148 = vld [vmem:[%s1 + $0x38] sm:$0xf]
  %v149 = vld [vmem:[%s1 + $0x3c] sm:$0xf]
  %v150 = vld [vmem:[%s1 + $0x40] sm:$0xf]
  %v151 = vld [vmem:[%s1 + $0x44] sm:$0xf]
  %v152 = vld [vmem:[%s1 + $0x48] sm:$0xf]
  %v153 = vld [vmem:[%s1 + $0x4c] sm:$0xf]
  %v154 = vld [vmem:[%s1 + $0x50] sm:$0xf]
  %v155 = vld [vmem:[%s1 + $0x54] sm:$0xf]
  %v156 = vld [vmem:[%s1 + $0x58] sm:$0xf]
  %v157 = vld [vmem:[%s1 + $0x5c] sm:$0xf]
  %v158 = vld [vmem:[%s1 + $0x60] sm:$0xf]
  %v159 = vld [vmem:[%s1 + $0x64] sm:$0xf]
  %v160 = vld [vmem:[%s1 + $0x68] sm:$0xf]
  %v161 = vld [vmem:[%s1 + $0x6c] sm:$0xf]
  %v162 = vld [vmem:[%s1 + $0x70] sm:$0xf]
  %v163 = vld [vmem:[%s1 + $0x74] sm:$0xf]
  %v164 = vld [vmem:[%s1 + $0x78] sm:$0xf]
  %v165 = vld [vmem:[%s1 + $0x7c] sm:$0xf]
  %v166 = vld [vmem:[%s1 + $0x80] sm:$0xf]
  %v167 = vld [vmem:[%s1 + $0x84] sm:$0xf]
  %v168 = vld [vmem:[%s1 + $0x88] sm:$0xf]
  %v169 = vld [vmem:[%s1 + $0x8c] sm:$0xf]
  %v170 = vld [vmem:[%s1 + $0x90] sm:$0xf]
  %v171 = vld [vmem:[%s1 + $0x94] sm:$0xf]
  %v172 = vld [vmem:[%s1 + $0x98] sm:$0xf]
  %v173 = vld [vmem:[%s1 + $0x9c] sm:$0xf]
  %v174 = vld [vmem:[%s1 + $0xa0] sm:$0xf]
  %v175 = vld [vmem:[%s1 + $0xa4] sm:$0xf]
  %v176 = vld [vmem:[%s1 + $0xa8] sm:$0xf]
  %v177 = vld [vmem:[%s1 + $0xac] sm:$0xf]
  %v178 = vld [vmem:[%s1 + $0xb0] sm:$0xf]
  %v179 = vld [vmem:[%s1 + $0xb4] sm:$0xf]
  %v180 = vld [vmem:[%s1 + $0xb8] sm:$0xf]
  %v181 = vld [vmem:[%s1 + $0xbc] sm:$0xf]
  %v182 = vld [vmem:[%s1 + $0xc0] sm:$0xf]
  %v183 = vld [vmem:[%s1 + $0xc4] sm:$0xf]
  %v184 = vld [vmem:[%s1 + $0xc8] sm:$0xf]
  %v185 = vld [vmem:[%s1 + $0xcc] sm:$0xf]
  %v186 = vld [vmem:[%s1 + $0xd0] sm:$0xf]
  %v187 = vld [vmem:[%s1 + $0xd4] sm:$0xf]
  %v188 = vld [vmem:[%s1 + $0xd8] sm:$0xf]
  %v189 = vld [vmem:[%s1 + $0xdc] sm:$0xf]
  %v190 = vld [vmem:[%s1 + $0xe0] sm:$0xf]
  %v191 = vld [vmem:[%s1 + $0xe4] sm:$0xf]
  %v192 = vld [vmem:[%s1 + $0xe8] sm:$0xf]
  %v193 = vld [vmem:[%s1 + $0xec] sm:$0xf]
  %v194 = vld [vmem:[%s1 + $0xf0] sm:$0xf]
  %v195 = vld [vmem:[%s1 + $0xf4] sm:$0xf]
  %v196 = vld [vmem:[%s1 + $0xf8] sm:$0xf]
  %v197 = vld [vmem:[%s1 + $0xfc] sm:$0xf]
  %v198 = vld [vmem:[%s1 + $0x100] sm:$0xf]
  %v199 = vld [vmem:[%s1 + $0x104] sm:$0xf]
  %v200 = vld [vmem:[%s1 + $0x108] sm:$0xf]
  %v201 = vld [vmem:[%s1 + $0x10c] sm:$0xf]
  %v202 = vld [vmem:[%s1 + $0x110] sm:$0xf]
  %v203 = vld [vmem:[%s1 + $0x114] sm:$0xf]
  %v204 = vld [vmem:[%s1 + $0x118] sm:$0xf]
  %v205 = vld [vmem:[%s1 + $0x11c] sm:$0xf]
  %v206 = vld [vmem:[%s1 + $0x120] sm:$0xf]
  %v207 = vld [vmem:[%s1 + $0x124] sm:$0xf]
  %v208 = vld [vmem:[%s1 + $0x128] sm:$0xf]
  %v209 = vld [vmem:[%s1 + $0x12c] sm:$0xf]
  %v210 = vld [vmem:[%s1 + $0x130] sm:$0xf]
  %v211 = vld [vmem:[%s1 + $0x134] sm:$0xf]
  %v212 = vld [vmem:[%s1 + $0x138] sm:$0xf]
  %v213 = vld [vmem:[%s1 + $0x13c] sm:$0xf]
  %v214 = vld [vmem:[%s1 + $0x140] sm:$0xf]
  %v215 = vld [vmem:[%s1 + $0x144] sm:$0xf]
  %v216 = vld [vmem:[%s1 + $0x148] sm:$0xf]
  %v217 = vld [vmem:[%s1 + $0x14c] sm:$0xf]
  %v218 = vld [vmem:[%s1 + $0x150] sm:$0xf]
  %v219 = vld [vmem:[%s1 + $0x154] sm:$0xf]
  %v220 = vld [vmem:[%s1 + $0x158] sm:$0xf]
  %v221 = vld [vmem:[%s1 + $0x15c] sm:$0xf]
  %v222 = vld [vmem:[%s1 + $0x160] sm:$0xf]
  %v223 = vld [vmem:[%s1 + $0x164] sm:$0xf]
  %v224 = vld [vmem:[%s1 + $0x168] sm:$0xf]
  %v225 = vld [vmem:[%s1 + $0x16c] sm:$0xf]
  %v226 = vld [vmem:[%s1 + $0x170] sm:$0xf]
  %v227 = vld [vmem:[%s1 + $0x174] sm:$0xf]
  %v228 = vld [vmem:[%s1 + $0x178] sm:$0xf]
  %v229 = vld [vmem:[%s1 + $0x17c] sm:$0xf]
  %v230 = vld [vmem:[%s1 + $0x180] sm:$0xf]
  %v231 = vld [vmem:[%s1 + $0x184] sm:$0xf]
  %v232 = vld [vmem:[%s1 + $0x188] sm:$0xf]
  %v233 = vld [vmem:[%s1 + $0x18c] sm:$0xf]
  %v234 = vld [vmem:[%s1 + $0x190] sm:$0xf]
  %v235 = vld [vmem:[%s1 + $0x194] sm:$0xf]
  %v236 = vld [vmem:[%s1 + $0x198] sm:$0xf]
  %v237 = vld [vmem:[%s1 + $0x19c] sm:$0xf]
  %v238 = vld [vmem:[%s1 + $0x1a0] sm:$0xf]
  %v239 = vld [vmem:[%s1 + $0x1a4] sm:$0xf]
  %v240 = vld [vmem:[%s1 + $0x1a8] sm:$0xf]
  %v241 = vld [vmem:[%s1 + $0x1ac] sm:$0xf]
  %v242 = vld [vmem:[%s1 + $0x1b0] sm:$0xf]
  %v243 = vld [vmem:[%s1 + $0x1b4] sm:$0xf]
  %v244 = vld [vmem:[%s1 + $0x1b8] sm:$0xf]
  %v245 = vld [vmem:[%s1 + $0x1bc] sm:$0xf]
  %v246 = vld [vmem:[%s1 + $0x1c0] sm:$0xf]
  %v247 = vld [vmem:[%s1 + $0x1c4] sm:$0xf]
  %v248 = vld [vmem:[%s1 + $0x1c8] sm:$0xf]
  %v249 = vld [vmem:[%s1 + $0x1cc] sm:$0xf]
  %v250 = vld [vmem:[%s1 + $0x1d0] sm:$0xf]
  %v251 = vld [vmem:[%s1 + $0x1d4] sm:$0xf]
  %v252 = vld [vmem:[%s1 + $0x1d8] sm:$0xf]
  %v253 = vld [vmem:[%s1 + $0x1dc] sm:$0xf]
  %v254 = vld [vmem:[%s1 + $0x1e0] sm:$0xf]
  %v255 = vld [vmem:[%s1 + $0x1e4] sm:$0xf]
  %v256 = vld [vmem:[%s1 + $0x1e8] sm:$0xf]
  %v257 = vld [vmem:[%s1 + $0x1ec] sm:$0xf]
  %v258 = vld [vmem:[%s1 + $0x1f0] sm:$0xf]
  %v259 = vld [vmem:[%s1 + $0x1f4] sm:$0xf]
  %v260 = vld [vmem:[%s1 + $0x1f8] sm:$0xf]
  %v261 = vld [vmem:[%s1 + $0x1fc] sm:$0xf]
  %v262 = vld [vmem:[%s1 + $0x200] sm:$0xf]
  %v263 = vld [vmem:[%s1 + $0x204] sm:$0xf]
  %v264 = vld [vmem:[%s1 + $0x208] sm:$0xf]
  %v265 = vld [vmem:[%s1 + $0x20c] sm:$0xf]
  %v266 = vld [vmem:[%s1 + $0x210] sm:$0xf]
  %v267 = vld [vmem:[%s1 + $0x214] sm:$0xf]
  %v268 = vld [vmem:[%s1 + $0x218] sm:$0xf]
  %v269 = vld [vmem:[%s1 + $0x21c] sm:$0xf]
  %v270 = vld [vmem:[%s1 + $0x220] sm:$0xf]
  %v271 = vld [vmem:[%s1 + $0x224] sm:$0xf]
  %v272 = vld [vmem:[%s1 + $0x228] sm:$0xf]
  %v273 = vld [vmem:[%s1 + $0x22c] sm:$0xf]
  %v274 = vld [vmem:[%s1 + $0x230] sm:$0xf]
  %v275 = vld [vmem:[%s1 + $0x234] sm:$0xf]
  %v276 = vld [vmem:[%s1 + $0x238] sm:$0xf]
  %v277 = vld [vmem:[%s1 + $0x23c] sm:$0xf]
  %v358 = vunpack.c.l.b16 %v54
  %v359 = vunpack.c.h.b16 %v54
  %v360 = vunpack.c.l.b16 %v55
  %v361 = vunpack.c.h.b16 %v55
  %v362 = vunpack.c.l.b16 %v56
  %v363 = vunpack.c.h.b16 %v56
  %v364 = vunpack.c.l.b16 %v57
  %v365 = vunpack.c.h.b16 %v57
  %v366 = vunpack.c.l.b16 %v58
  %v367 = vunpack.c.l.b16 %v59
  %v368 = vunpack.c.h.b16 %v59
  %v369 = vunpack.c.l.b16 %v60
  %v370 = vunpack.c.h.b16 %v60
  %v371 = vunpack.c.l.b16 %v61
  %v372 = vunpack.c.h.b16 %v61
  %v373 = vunpack.c.l.b16 %v62
  %v374 = vunpack.c.h.b16 %v62
  %v375 = vunpack.c.l.b16 %v63
  %v376 = vunpack.c.l.b16 %v64
  %v377 = vunpack.c.h.b16 %v64
  %v378 = vunpack.c.l.b16 %v65
  %v379 = vunpack.c.h.b16 %v65
  %v380 = vunpack.c.l.b16 %v66
  %v381 = vunpack.c.h.b16 %v66
  %v382 = vunpack.c.l.b16 %v67
  %v383 = vunpack.c.h.b16 %v67
  %v384 = vunpack.c.l.b16 %v68
  %v385 = vunpack.c.l.b16 %v69
  %v386 = vunpack.c.h.b16 %v69
  %v387 = vunpack.c.l.b16 %v70
  %v388 = vunpack.c.h.b16 %v70
  %v389 = vunpack.c.l.b16 %v71
  %v390 = vunpack.c.h.b16 %v71
  %v391 = vunpack.c.l.b16 %v72
  %v392 = vunpack.c.h.b16 %v72
  %v393 = vunpack.c.l.b16 %v73
  %v394 = vunpack.c.l.b16 %v74
  %v395 = vunpack.c.h.b16 %v74
  %v396 = vunpack.c.l.b16 %v75
  %v397 = vunpack.c.h.b16 %v75
  %v398 = vunpack.c.l.b16 %v76
  %v399 = vunpack.c.h.b16 %v76
  %v400 = vunpack.c.l.b16 %v77
  %v401 = vunpack.c.h.b16 %v77
  %v402 = vunpack.c.l.b16 %v78
  %v403 = vunpack.c.l.b16 %v79
  %v404 = vunpack.c.h.b16 %v79
  %v405 = vunpack.c.l.b16 %v80
  %v406 = vunpack.c.h.b16 %v80
  %v407 = vunpack.c.l.b16 %v81
  %v408 = vunpack.c.h.b16 %v81
  %v409 = vunpack.c.l.b16 %v82
  %v410 = vunpack.c.h.b16 %v82
  %v411 = vunpack.c.l.b16 %v83
  %v412 = vunpack.c.l.b16 %v84
  %v413 = vunpack.c.h.b16 %v84
  %v414 = vunpack.c.l.b16 %v85
  %v415 = vunpack.c.h.b16 %v85
  %v416 = vunpack.c.l.b16 %v86
  %v417 = vunpack.c.h.b16 %v86
  %v418 = vunpack.c.l.b16 %v87
  %v419 = vunpack.c.h.b16 %v87
  %v420 = vunpack.c.l.b16 %v88
  %v421 = vunpack.c.l.b16 %v89
  %v422 = vunpack.c.h.b16 %v89
  %v423 = vunpack.c.l.b16 %v90
  %v424 = vunpack.c.h.b16 %v90
  %v425 = vunpack.c.l.b16 %v91
  %v426 = vunpack.c.h.b16 %v91
  %v427 = vunpack.c.l.b16 %v92
  %v428 = vunpack.c.h.b16 %v92
  %v429 = vunpack.c.l.b16 %v93
  %v430 = vunpack.c.l.b16 %v94
  %v431 = vunpack.c.h.b16 %v94
  %v432 = vunpack.c.l.b16 %v95
  %v433 = vunpack.c.h.b16 %v95
  %v434 = vunpack.c.l.b16 %v96
  %v435 = vunpack.c.h.b16 %v96
  %v436 = vunpack.c.l.b16 %v97
  %v437 = vunpack.c.h.b16 %v97
  %v438 = vunpack.c.l.b16 %v98
  %v439 = vunpack.c.l.b16 %v99
  %v440 = vunpack.c.h.b16 %v99
  %v441 = vunpack.c.l.b16 %v100
  %v442 = vunpack.c.h.b16 %v100
  %v443 = vunpack.c.l.b16 %v101
  %v444 = vunpack.c.h.b16 %v101
  %v445 = vunpack.c.l.b16 %v102
  %v446 = vunpack.c.h.b16 %v102
  %v447 = vunpack.c.l.b16 %v103
  %v448 = vunpack.c.l.b16 %v104
  %v449 = vunpack.c.h.b16 %v104
  %v450 = vunpack.c.l.b16 %v105
  %v451 = vunpack.c.h.b16 %v105
  %v452 = vunpack.c.l.b16 %v106
  %v453 = vunpack.c.h.b16 %v106
  %v454 = vunpack.c.l.b16 %v107
  %v455 = vunpack.c.h.b16 %v107
  %v456 = vunpack.c.l.b16 %v108
  %v457 = vunpack.c.l.b16 %v109
  %v458 = vunpack.c.h.b16 %v109
  %v459 = vunpack.c.l.b16 %v110
  %v460 = vunpack.c.h.b16 %v110
  %v461 = vunpack.c.l.b16 %v111
  %v462 = vunpack.c.h.b16 %v111
  %v463 = vunpack.c.l.b16 %v112
  %v464 = vunpack.c.h.b16 %v112
  %v465 = vunpack.c.l.b16 %v113
  %v466 = vunpack.c.l.b16 %v114
  %v467 = vunpack.c.h.b16 %v114
  %v468 = vunpack.c.l.b16 %v115
  %v469 = vunpack.c.h.b16 %v115
  %v470 = vunpack.c.l.b16 %v116
  %v471 = vunpack.c.h.b16 %v116
  %v472 = vunpack.c.l.b16 %v117
  %v473 = vunpack.c.h.b16 %v117
  %v474 = vunpack.c.l.b16 %v118
  %v475 = vunpack.c.l.b16 %v119
  %v476 = vunpack.c.h.b16 %v119
  %v477 = vunpack.c.l.b16 %v120
  %v478 = vunpack.c.h.b16 %v120
  %v479 = vunpack.c.l.b16 %v121
  %v480 = vunpack.c.h.b16 %v121
  %v481 = vunpack.c.l.b16 %v122
  %v482 = vunpack.c.h.b16 %v122
  %v483 = vunpack.c.l.b16 %v123
  %v484 = vunpack.c.l.b16 %v124
  %v485 = vunpack.c.h.b16 %v124
  %v486 = vunpack.c.l.b16 %v125
  %v487 = vunpack.c.h.b16 %v125
  %v488 = vunpack.c.l.b16 %v126
  %v489 = vunpack.c.h.b16 %v126
  %v490 = vunpack.c.l.b16 %v127
  %v491 = vunpack.c.h.b16 %v127
  %v492 = vunpack.c.l.b16 %v128
  %v493 = vunpack.c.l.b16 %v129
  %v494 = vunpack.c.h.b16 %v129
  %v495 = vunpack.c.l.b16 %v130
  %v496 = vunpack.c.h.b16 %v130
  %v497 = vunpack.c.l.b16 %v131
  %v498 = vunpack.c.h.b16 %v131
  %v499 = vunpack.c.l.b16 %v132
  %v500 = vunpack.c.h.b16 %v132
  %v501 = vunpack.c.l.b16 %v133
  %v502 = vpack.c.b16 %v367, %v358
  %v503 = vpack.c.b16 %v368, %v359
  %v504 = vpack.c.b16 %v369, %v360
  %v505 = vpack.c.b16 %v370, %v361
  %v506 = vpack.c.b16 %v371, %v362
  %v507 = vpack.c.b16 %v372, %v363
  %v508 = vpack.c.b16 %v373, %v364
  %v509 = vpack.c.b16 %v374, %v365
  %v510 = vpack.c.b16 %v375, %v366
  %v511 = vpack.c.b16 %v385, %v376
  %v512 = vpack.c.b16 %v386, %v377
  %v513 = vpack.c.b16 %v387, %v378
  %v514 = vpack.c.b16 %v388, %v379
  %v515 = vpack.c.b16 %v389, %v380
  %v516 = vpack.c.b16 %v390, %v381
  %v517 = vpack.c.b16 %v391, %v382
  %v518 = vpack.c.b16 %v392, %v383
  %v519 = vpack.c.b16 %v393, %v384
  %v520 = vpack.c.b16 %v403, %v394
  %v521 = vpack.c.b16 %v404, %v395
  %v522 = vpack.c.b16 %v405, %v396
  %v523 = vpack.c.b16 %v406, %v397
  %v524 = vpack.c.b16 %v407, %v398
  %v525 = vpack.c.b16 %v408, %v399
  %v526 = vpack.c.b16 %v409, %v400
  %v527 = vpack.c.b16 %v410, %v401
  %v528 = vpack.c.b16 %v411, %v402
  %v529 = vpack.c.b16 %v421, %v412
  %v530 = vpack.c.b16 %v422, %v413
  %v531 = vpack.c.b16 %v423, %v414
  %v532 = vpack.c.b16 %v424, %v415
  %v533 = vpack.c.b16 %v425, %v416
  %v534 = vpack.c.b16 %v426, %v417
  %v535 = vpack.c.b16 %v427, %v418
  %v536 = vpack.c.b16 %v428, %v419
  %v537 = vpack.c.b16 %v429, %v420
  %v538 = vpack.c.b16 %v439, %v430
  %v539 = vpack.c.b16 %v440, %v431
  %v540 = vpack.c.b16 %v441, %v432
  %v541 = vpack.c.b16 %v442, %v433
  %v542 = vpack.c.b16 %v443, %v434
  %v543 = vpack.c.b16 %v444, %v435
  %v544 = vpack.c.b16 %v445, %v436
  %v545 = vpack.c.b16 %v446, %v437
  %v546 = vpack.c.b16 %v447, %v438
  %v547 = vpack.c.b16 %v457, %v448
  %v548 = vpack.c.b16 %v458, %v449
  %v549 = vpack.c.b16 %v459, %v450
  %v550 = vpack.c.b16 %v460, %v451
  %v551 = vpack.c.b16 %v461, %v452
  %v552 = vpack.c.b16 %v462, %v453
  %v553 = vpack.c.b16 %v463, %v454
  %v554 = vpack.c.b16 %v464, %v455
  %v555 = vpack.c.b16 %v465, %v456
  %v556 = vpack.c.b16 %v475, %v466
  %v557 = vpack.c.b16 %v476, %v467
  %v558 = vpack.c.b16 %v477, %v468
  %v559 = vpack.c.b16 %v478, %v469
  %v560 = vpack.c.b16 %v479, %v470
  %v561 = vpack.c.b16 %v480, %v471
  %v562 = vpack.c.b16 %v481, %v472
  %v563 = vpack.c.b16 %v482, %v473
  %v564 = vpack.c.b16 %v483, %v474
  %v565 = vpack.c.b16 %v493, %v484
  %v566 = vpack.c.b16 %v494, %v485
  %v567 = vpack.c.b16 %v495, %v486
  %v568 = vpack.c.b16 %v496, %v487
  %v569 = vpack.c.b16 %v497, %v488
  %v570 = vpack.c.b16 %v498, %v489
  %v571 = vpack.c.b16 %v499, %v490
  %v572 = vpack.c.b16 %v500, %v491
  %v573 = vpack.c.b16 %v501, %v492
  %v790 = vunpack.c.l.b16 %v134
  %v791 = vunpack.c.l.b16 %v135
  %v792 = vunpack.c.l.b16 %v136
  %v793 = vunpack.c.l.b16 %v137
  %v794 = vunpack.c.l.b16 %v138
  %v795 = vunpack.c.l.b16 %v139
  %v796 = vunpack.c.l.b16 %v140
  %v797 = vunpack.c.l.b16 %v141
  %v798 = vunpack.c.l.b16 %v142
  %v799 = vunpack.c.l.b16 %v143
  %v800 = vunpack.c.l.b16 %v144
  %v801 = vunpack.c.l.b16 %v145
  %v802 = vunpack.c.l.b16 %v146
  %v803 = vunpack.c.l.b16 %v147
  %v804 = vunpack.c.l.b16 %v148
  %v805 = vunpack.c.l.b16 %v149
  %v806 = vunpack.c.l.b16 %v150
  %v807 = vunpack.c.l.b16 %v151
  %v808 = vunpack.c.l.b16 %v152
  %v809 = vunpack.c.l.b16 %v153
  %v810 = vunpack.c.l.b16 %v154
  %v811 = vunpack.c.l.b16 %v155
  %v812 = vunpack.c.l.b16 %v156
  %v813 = vunpack.c.l.b16 %v157
  %v814 = vunpack.c.l.b16 %v158
  %v815 = vunpack.c.l.b16 %v159
  %v816 = vunpack.c.l.b16 %v160
  %v817 = vunpack.c.l.b16 %v161
  %v818 = vunpack.c.l.b16 %v162
  %v819 = vunpack.c.l.b16 %v163
  %v820 = vunpack.c.l.b16 %v164
  %v821 = vunpack.c.l.b16 %v165
  %v822 = vunpack.c.l.b16 %v166
  %v823 = vunpack.c.l.b16 %v167
  %v824 = vunpack.c.l.b16 %v168
  %v825 = vunpack.c.l.b16 %v169
  %v826 = vunpack.c.l.b16 %v170
  %v827 = vunpack.c.l.b16 %v171
  %v828 = vunpack.c.l.b16 %v172
  %v829 = vunpack.c.l.b16 %v173
  %v830 = vunpack.c.l.b16 %v174
  %v831 = vunpack.c.l.b16 %v175
  %v832 = vunpack.c.l.b16 %v176
  %v833 = vunpack.c.l.b16 %v177
  %v834 = vunpack.c.l.b16 %v178
  %v835 = vunpack.c.l.b16 %v179
  %v836 = vunpack.c.l.b16 %v180
  %v837 = vunpack.c.l.b16 %v181
  %v838 = vunpack.c.l.b16 %v182
  %v839 = vunpack.c.l.b16 %v183
  %v840 = vunpack.c.l.b16 %v184
  %v841 = vunpack.c.l.b16 %v185
  %v842 = vunpack.c.l.b16 %v186
  %v843 = vunpack.c.l.b16 %v187
  %v844 = vunpack.c.l.b16 %v188
  %v845 = vunpack.c.l.b16 %v189
  %v846 = vunpack.c.l.b16 %v190
  %v847 = vunpack.c.l.b16 %v191
  %v848 = vunpack.c.l.b16 %v192
  %v849 = vunpack.c.l.b16 %v193
  %v850 = vunpack.c.l.b16 %v194
  %v851 = vunpack.c.l.b16 %v195
  %v852 = vunpack.c.l.b16 %v196
  %v853 = vunpack.c.l.b16 %v197
  %v854 = vunpack.c.l.b16 %v198
  %v855 = vunpack.c.l.b16 %v199
  %v856 = vunpack.c.l.b16 %v200
  %v857 = vunpack.c.l.b16 %v201
  %v858 = vunpack.c.l.b16 %v202
  %v859 = vunpack.c.l.b16 %v203
  %v860 = vunpack.c.l.b16 %v204
  %v861 = vunpack.c.l.b16 %v205
  %v862 = vunpack.c.l.b16 %v206
  %v863 = vunpack.c.l.b16 %v207
  %v864 = vunpack.c.l.b16 %v208
  %v865 = vunpack.c.l.b16 %v209
  %v866 = vunpack.c.l.b16 %v210
  %v867 = vunpack.c.l.b16 %v211
  %v868 = vunpack.c.l.b16 %v212
  %v869 = vunpack.c.l.b16 %v213
  %v870 = vunpack.c.l.b16 %v214
  %v871 = vunpack.c.l.b16 %v215
  %v872 = vunpack.c.l.b16 %v216
  %v873 = vunpack.c.l.b16 %v217
  %v874 = vunpack.c.l.b16 %v218
  %v875 = vunpack.c.l.b16 %v219
  %v876 = vunpack.c.l.b16 %v220
  %v877 = vunpack.c.l.b16 %v221
  %v878 = vunpack.c.l.b16 %v222
  %v879 = vunpack.c.l.b16 %v223
  %v880 = vunpack.c.l.b16 %v224
  %v881 = vunpack.c.l.b16 %v225
  %v882 = vunpack.c.l.b16 %v226
  %v883 = vunpack.c.l.b16 %v227
  %v884 = vunpack.c.l.b16 %v228
  %v885 = vunpack.c.l.b16 %v229
  %v886 = vunpack.c.l.b16 %v230
  %v887 = vunpack.c.l.b16 %v231
  %v888 = vunpack.c.l.b16 %v232
  %v889 = vunpack.c.l.b16 %v233
  %v890 = vunpack.c.l.b16 %v234
  %v891 = vunpack.c.l.b16 %v235
  %v892 = vunpack.c.l.b16 %v236
  %v893 = vunpack.c.l.b16 %v237
  %v894 = vunpack.c.l.b16 %v238
  %v895 = vunpack.c.l.b16 %v239
  %v896 = vunpack.c.l.b16 %v240
  %v897 = vunpack.c.l.b16 %v241
  %v898 = vunpack.c.l.b16 %v242
  %v899 = vunpack.c.l.b16 %v243
  %v900 = vunpack.c.l.b16 %v244
  %v901 = vunpack.c.l.b16 %v245
  %v902 = vunpack.c.l.b16 %v246
  %v903 = vunpack.c.l.b16 %v247
  %v904 = vunpack.c.l.b16 %v248
  %v905 = vunpack.c.l.b16 %v249
  %v906 = vunpack.c.l.b16 %v250
  %v907 = vunpack.c.l.b16 %v251
  %v908 = vunpack.c.l.b16 %v252
  %v909 = vunpack.c.l.b16 %v253
  %v910 = vunpack.c.l.b16 %v254
  %v911 = vunpack.c.l.b16 %v255
  %v912 = vunpack.c.l.b16 %v256
  %v913 = vunpack.c.l.b16 %v257
  %v914 = vunpack.c.l.b16 %v258
  %v915 = vunpack.c.l.b16 %v259
  %v916 = vunpack.c.l.b16 %v260
  %v917 = vunpack.c.l.b16 %v261
  %v918 = vunpack.c.l.b16 %v262
  %v919 = vunpack.c.l.b16 %v263
  %v920 = vunpack.c.l.b16 %v264
  %v921 = vunpack.c.l.b16 %v265
  %v922 = vunpack.c.l.b16 %v266
  %v923 = vunpack.c.l.b16 %v267
  %v924 = vunpack.c.l.b16 %v268
  %v925 = vunpack.c.l.b16 %v269
  %v926 = vunpack.c.l.b16 %v270
  %v927 = vunpack.c.l.b16 %v271
  %v928 = vunpack.c.l.b16 %v272
  %v929 = vunpack.c.l.b16 %v273
  %v930 = vunpack.c.l.b16 %v274
  %v931 = vunpack.c.l.b16 %v275
  %v932 = vunpack.c.l.b16 %v276
  %v933 = vunpack.c.l.b16 %v277
  %v934 = vpack.c.b16 %v791, %v790
  %v935 = vpack.c.b16 %v793, %v792
  %v936 = vpack.c.b16 %v795, %v794
  %v937 = vpack.c.b16 %v797, %v796
  %v938 = vpack.c.b16 %v799, %v798
  %v939 = vpack.c.b16 %v801, %v800
  %v940 = vpack.c.b16 %v803, %v802
  %v941 = vpack.c.b16 %v805, %v804
  %v942 = vpack.c.b16 %v807, %v806
  %v943 = vpack.c.b16 %v809, %v808
  %v944 = vpack.c.b16 %v811, %v810
  %v945 = vpack.c.b16 %v813, %v812
  %v946 = vpack.c.b16 %v815, %v814
  %v947 = vpack.c.b16 %v817, %v816
  %v948 = vpack.c.b16 %v819, %v818
  %v949 = vpack.c.b16 %v821, %v820
  %v950 = vpack.c.b16 %v823, %v822
  %v951 = vpack.c.b16 %v825, %v824
  %v952 = vpack.c.b16 %v827, %v826
  %v953 = vpack.c.b16 %v829, %v828
  %v954 = vpack.c.b16 %v831, %v830
  %v955 = vpack.c.b16 %v833, %v832
  %v956 = vpack.c.b16 %v835, %v834
  %v957 = vpack.c.b16 %v837, %v836
  %v958 = vpack.c.b16 %v839, %v838
  %v959 = vpack.c.b16 %v841, %v840
  %v960 = vpack.c.b16 %v843, %v842
  %v961 = vpack.c.b16 %v845, %v844
  %v962 = vpack.c.b16 %v847, %v846
  %v963 = vpack.c.b16 %v849, %v848
  %v964 = vpack.c.b16 %v851, %v850
  %v965 = vpack.c.b16 %v853, %v852
  %v966 = vpack.c.b16 %v855, %v854
  %v967 = vpack.c.b16 %v857, %v856
  %v968 = vpack.c.b16 %v859, %v858
  %v969 = vpack.c.b16 %v861, %v860
  %v970 = vpack.c.b16 %v863, %v862
  %v971 = vpack.c.b16 %v865, %v864
  %v972 = vpack.c.b16 %v867, %v866
  %v973 = vpack.c.b16 %v869, %v868
  %v974 = vpack.c.b16 %v871, %v870
  %v975 = vpack.c.b16 %v873, %v872
  %v976 = vpack.c.b16 %v875, %v874
  %v977 = vpack.c.b16 %v877, %v876
  %v978 = vpack.c.b16 %v879, %v878
  %v979 = vpack.c.b16 %v881, %v880
  %v980 = vpack.c.b16 %v883, %v882
  %v981 = vpack.c.b16 %v885, %v884
  %v982 = vpack.c.b16 %v887, %v886
  %v983 = vpack.c.b16 %v889, %v888
  %v984 = vpack.c.b16 %v891, %v890
  %v985 = vpack.c.b16 %v893, %v892
  %v986 = vpack.c.b16 %v895, %v894
  %v987 = vpack.c.b16 %v897, %v896
  %v988 = vpack.c.b16 %v899, %v898
  %v989 = vpack.c.b16 %v901, %v900
  %v990 = vpack.c.b16 %v903, %v902
  %v991 = vpack.c.b16 %v905, %v904
  %v992 = vpack.c.b16 %v907, %v906
  %v993 = vpack.c.b16 %v909, %v908
  %v994 = vpack.c.b16 %v911, %v910
  %v995 = vpack.c.b16 %v913, %v912
  %v996 = vpack.c.b16 %v915, %v914
  %v997 = vpack.c.b16 %v917, %v916
  %v998 = vpack.c.b16 %v919, %v918
  %v999 = vpack.c.b16 %v921, %v920
  %v1000 = vpack.c.b16 %v923, %v922
  %v1001 = vpack.c.b16 %v925, %v924
  %v1002 = vpack.c.b16 %v927, %v926
  %v1003 = vpack.c.b16 %v929, %v928
  %v1004 = vpack.c.b16 %v931, %v930
  %v1005 = vpack.c.b16 %v933, %v932
  %1078 = vmatprep.subr.bf16.mxu0 0
  %1079 = vmatpush1.bf16.msra.mxu0 %v934
  %1080 = vmatprep.subr.bf16.mxu0 0
  %1081 = vmatpush1.bf16.msra.mxu0 %v935
  %1082 = vmatprep.subr.bf16.mxu0 0
  %1083 = vmatpush1.bf16.msra.mxu0 %v936
  %1084 = vmatprep.subr.bf16.mxu0 0
  %1085 = vmatpush1.bf16.msra.mxu0 %v937
  %1086 = vmatprep.subr.bf16.mxu0 0
  %1087 = vmatpush1.bf16.msra.mxu0 %v938
  %1088 = vmatprep.subr.bf16.mxu0 0
  %1089 = vmatpush1.bf16.msra.mxu0 %v939
  %1090 = vmatprep.subr.bf16.mxu0 0
  %1091 = vmatpush1.bf16.msra.mxu0 %v940
  %1092 = vmatprep.subr.bf16.mxu0 0
  %1093 = vmatpush1.bf16.msra.mxu0 %v941
  %1094 = vmatprep.subr.bf16.mxu0 0
  %1095 = vmatpush1.bf16.msra.mxu0 %v942
  %1096 = vmatprep.subr.bf16.mxu0 0
  %1097 = vmatpush1.bf16.msra.mxu0 %v943
  %1098 = vmatprep.subr.bf16.mxu0 0
  %1099 = vmatpush1.bf16.msra.mxu0 %v944
  %1100 = vmatprep.subr.bf16.mxu0 0
  %1101 = vmatpush1.bf16.msra.mxu0 %v945
  %1102 = vmatprep.subr.bf16.mxu0 0
  %1103 = vmatpush1.bf16.msra.mxu0 %v946
  %1104 = vmatprep.subr.bf16.mxu0 0
  %1105 = vmatpush1.bf16.msra.mxu0 %v947
  %1106 = vmatprep.subr.bf16.mxu0 0
  %1107 = vmatpush1.bf16.msra.mxu0 %v948
  %1108 = vmatprep.subr.bf16.mxu0 0
  %1109 = vmatpush1.bf16.msra.mxu0 %v949
  %1110 = vmatprep.mubr.bf16.mxu0 %v503
  %1111 = vmatmul.mubr.bf16.gmra.mrb[0].mxu0 %v502
  %v1112 = vpop.f32.mrb[0].mxu0
  %v1113 = vadd.f32 0.0, %v1112
  %v1114 = vpop.f32.mrb[0].mxu0
  %v1115 = vpop.f32.mrb[0].mxu0
  %v1116 = vadd.f32 0.0, %v1115
  %v1117 = vpop.f32.mrb[0].mxu0
  %1118 = vmatprep.mubr.bf16.mxu0 %v512
  %1119 = vmatmul.mubr.bf16.gmra.mrb[0].mxu0 %v511
  %v1120 = vpop.f32.mrb[0].mxu0
  %v1121 = vadd.f32 0.0, %v1120
  %v1122 = vpop.f32.mrb[0].mxu0
  %v1123 = vpop.f32.mrb[0].mxu0
  %v1124 = vadd.f32 0.0, %v1123
  %v1125 = vpop.f32.mrb[0].mxu0
  %1126 = vmatprep.mubr.bf16.mxu0 %v521
  %1127 = vmatmul.mubr.bf16.gmra.mrb[0].mxu0 %v520
  %v1128 = vpop.f32.mrb[0].mxu0
  %v1129 = vadd.f32 0.0, %v1128
  %v1130 = vpop.f32.mrb[0].mxu0
  %v1131 = vpop.f32.mrb[0].mxu0
  %v1132 = vadd.f32 0.0, %v1131
  %v1133 = vpop.f32.mrb[0].mxu0
  %1134 = vmatprep.mubr.bf16.mxu0 %v530
  %1135 = vmatmul.mubr.bf16.gmra.mrb[0].mxu0 %v529
  %v1136 = vpop.f32.mrb[0].mxu0
  %v1137 = vadd.f32 0.0, %v1136
  %v1138 = vpop.f32.mrb[0].mxu0
  %v1139 = vpop.f32.mrb[0].mxu0
  %v1140 = vadd.f32 0.0, %v1139
  %v1141 = vpop.f32.mrb[0].mxu0
  %1142 = vmatprep.mubr.bf16.mxu0 %v539
  %1143 = vmatmul.mubr.bf16.gmra.mrb[0].mxu0 %v538
  %v1144 = vpop.f32.mrb[0].mxu0
  %v1145 = vadd.f32 0.0, %v1144
  %v1146 = vpop.f32.mrb[0].mxu0
  %v1147 = vpop.f32.mrb[0].mxu0
  %v1148 = vadd.f32 0.0, %v1147
  %v1149 = vpop.f32.mrb[0].mxu0
  %1150 = vmatprep.mubr.bf16.mxu0 %v548
  %1151 = vmatmul.mubr.bf16.gmra.mrb[0].mxu0 %v547
  %v1152 = vpop.f32.mrb[0].mxu0
  %v1153 = vadd.f32 0.0, %v1152
  %v1154 = vpop.f32.mrb[0].mxu0
  %v1155 = vpop.f32.mrb[0].mxu0
  %v1156 = vadd.f32 0.0, %v1155
  %v1157 = vpop.f32.mrb[0].mxu0
  %1158 = vmatprep.mubr.bf16.mxu0 %v557
  %1159 = vmatmul.mubr.bf16.gmra.mrb[0].mxu0 %v556
  %v1160 = vpop.f32.mrb[0].mxu0
  %v1161 = vadd.f32 0.0, %v1160
  %v1162 = vpop.f32.mrb[0].mxu0
  %v1163 = vpop.f32.mrb[0].mxu0
  %v1164 = vadd.f32 0.0, %v1163
  %v1165 = vpop.f32.mrb[0].mxu0
  %1166 = vmatprep.mubr.bf16.mxu0 %v566
  %1167 = vmatmul.mubr.bf16.gmra.mrb[0].mxu0 %v565
  %v1168 = vpop.f32.mrb[0].mxu0
  %v1169 = vadd.f32 0.0, %v1168
  %v1170 = vpop.f32.mrb[0].mxu0
  %v1171 = vpop.f32.mrb[0].mxu0
  %v1172 = vadd.f32 0.0, %v1171
  %v1173 = vpop.f32.mrb[0].mxu0
  %1174 = vdwg.mxu0
  %1175 = vmatprep.subr.bf16.mxu0 0
  %1176 = vmatpush1.bf16.msra.mxu0 %v950
  %1177 = vmatprep.subr.bf16.mxu0 0
  %1178 = vmatpush1.bf16.msra.mxu0 %v951
  %1179 = vmatprep.subr.bf16.mxu0 0
  %1180 = vmatpush1.bf16.msra.mxu0 %v952
  %1181 = vmatprep.subr.bf16.mxu0 0
  %1182 = vmatpush1.bf16.msra.mxu0 %v953
  %1183 = vmatprep.subr.bf16.mxu0 0
  %1184 = vmatpush1.bf16.msra.mxu0 %v954
  %1185 = vmatprep.subr.bf16.mxu0 0
  %1186 = vmatpush1.bf16.msra.mxu0 %v955
  %1187 = vmatprep.subr.bf16.mxu0 0
  %1188 = vmatpush1.bf16.msra.mxu0 %v956
  %1189 = vmatprep.subr.bf16.mxu0 0
  %1190 = vmatpush1.bf16.msra.mxu0 %v957
  %1191 = vmatprep.subr.bf16.mxu0 0
  %1192 = vmatpush1.bf16.msra.mxu0 %v958
  %1193 = vmatprep.subr.bf16.mxu0 0
  %1194 = vmatpush1.bf16.msra.mxu0 %v959
  %1195 = vmatprep.subr.bf16.mxu0 0
  %1196 = vmatpush1.bf16.msra.mxu0 %v960
  %1197 = vmatprep.subr.bf16.mxu0 0
  %1198 = vmatpush1.bf16.msra.mxu0 %v961
  %1199 = vmatprep.subr.bf16.mxu0 0
  %1200 = vmatpush1.bf16.msra.mxu0 %v962
  %1201 = vmatprep.subr.bf16.mxu0 0
  %1202 = vmatpush1.bf16.msra.mxu0 %v963
  %1203 = vmatprep.subr.bf16.mxu0 0
  %1204 = vmatpush1.bf16.msra.mxu0 %v964
  %1205 = vmatprep.subr.bf16.mxu0 0
  %1206 = vmatpush1.bf16.msra.mxu0 %v965
  %1207 = vmatprep.mubr.bf16.mxu0 %v505
  %1208 = vmatmul.mubr.bf16.gmra.mrb[0].mxu0 %v504
  %v1209 = vpop.f32.mrb[0].mxu0
  %v1210 = vadd.f32 %v1113, %v1209
  %v1211 = vpop.f32.mrb[0].mxu0
  %v1212 = vpop.f32.mrb[0].mxu0
  %v1213 = vadd.f32 %v1116, %v1212
  %v1214 = vpop.f32.mrb[0].mxu0
  %1215 = vmatprep.mubr.bf16.mxu0 %v514
  %1216 = vmatmul.mubr.bf16.gmra.mrb[0].mxu0 %v513
  %v1217 = vpop.f32.mrb[0].mxu0
  %v1218 = vadd.f32 %v1121, %v1217
  %v1219 = vpop.f32.mrb[0].mxu0
  %v1220 = vpop.f32.mrb[0].mxu0
  %v1221 = vadd.f32 %v1124, %v1220
  %v1222 = vpop.f32.mrb[0].mxu0
  %1223 = vmatprep.mubr.bf16.mxu0 %v523
  %1224 = vmatmul.mubr.bf16.gmra.mrb[0].mxu0 %v522
  %v1225 = vpop.f32.mrb[0].mxu0
  %v1226 = vadd.f32 %v1129, %v1225
  %v1227 = vpop.f32.mrb[0].mxu0
  %v1228 = vpop.f32.mrb[0].mxu0
  %v1229 = vadd.f32 %v1132, %v1228
  %v1230 = vpop.f32.mrb[0].mxu0
  %1231 = vmatprep.mubr.bf16.mxu0 %v532
  %1232 = vmatmul.mubr.bf16.gmra.mrb[0].mxu0 %v531
  %v1233 = vpop.f32.mrb[0].mxu0
  %v1234 = vadd.f32 %v1137, %v1233
  %v1235 = vpop.f32.mrb[0].mxu0
  %v1236 = vpop.f32.mrb[0].mxu0
  %v1237 = vadd.f32 %v1140, %v1236
  %v1238 = vpop.f32.mrb[0].mxu0
  %1239 = vmatprep.mubr.bf16.mxu0 %v541
  %1240 = vmatmul.mubr.bf16.gmra.mrb[0].mxu0 %v540
  %v1241 = vpop.f32.mrb[0].mxu0
  %v1242 = vadd.f32 %v1145, %v1241
  %v1243 = vpop.f32.mrb[0].mxu0
  %v1244 = vpop.f32.mrb[0].mxu0
  %v1245 = vadd.f32 %v1148, %v1244
  %v1246 = vpop.f32.mrb[0].mxu0
  %1247 = vmatprep.mubr.bf16.mxu0 %v550
  %1248 = vmatmul.mubr.bf16.gmra.mrb[0].mxu0 %v549
  %v1249 = vpop.f32.mrb[0].mxu0
  %v1250 = vadd.f32 %v1153, %v1249
  %v1251 = vpop.f32.mrb[0].mxu0
  %v1252 = vpop.f32.mrb[0].mxu0
  %v1253 = vadd.f32 %v1156, %v1252
  %v1254 = vpop.f32.mrb[0].mxu0
  %1255 = vmatprep.mubr.bf16.mxu0 %v559
  %1256 = vmatmul.mubr.bf16.gmra.mrb[0].mxu0 %v558
  %v1257 = vpop.f32.mrb[0].mxu0
  %v1258 = vadd.f32 %v1161, %v1257
  %v1259 = vpop.f32.mrb[0].mxu0
  %v1260 = vpop.f32.mrb[0].mxu0
  %v1261 = vadd.f32 %v1164, %v1260
  %v1262 = vpop.f32.mrb[0].mxu0
  %1263 = vmatprep.mubr.bf16.mxu0 %v568
  %1264 = vmatmul.mubr.bf16.gmra.mrb[0].mxu0 %v567
  %v1265 = vpop.f32.mrb[0].mxu0
  %v1266 = vadd.f32 %v1169, %v1265
  %v1267 = vpop.f32.mrb[0].mxu0
  %v1268 = vpop.f32.mrb[0].mxu0
  %v1269 = vadd.f32 %v1172, %v1268
  %v1270 = vpop.f32.mrb[0].mxu0
  %1271 = vdwg.mxu0
  %1272 = vmatprep.subr.bf16.mxu0 0
  %1273 = vmatpush1.bf16.msra.mxu0 %v966
  %1274 = vmatprep.subr.bf16.mxu0 0
  %1275 = vmatpush1.bf16.msra.mxu0 %v967
  %1276 = vmatprep.subr.bf16.mxu0 0
  %1277 = vmatpush1.bf16.msra.mxu0 %v968
  %1278 = vmatprep.subr.bf16.mxu0 0
  %1279 = vmatpush1.bf16.msra.mxu0 %v969
  %1280 = vmatprep.subr.bf16.mxu0 0
  %1281 = vmatpush1.bf16.msra.mxu0 %v970
  %1282 = vmatprep.subr.bf16.mxu0 0
  %1283 = vmatpush1.bf16.msra.mxu0 %v971
  %1284 = vmatprep.subr.bf16.mxu0 0
  %1285 = vmatpush1.bf16.msra.mxu0 %v972
  %1286 = vmatprep.subr.bf16.mxu0 0
  %1287 = vmatpush1.bf16.msra.mxu0 %v973
  %1288 = vmatprep.subr.bf16.mxu0 0
  %1289 = vmatpush1.bf16.msra.mxu0 %v974
  %1290 = vmatprep.subr.bf16.mxu0 0
  %1291 = vmatpush1.bf16.msra.mxu0 %v975
  %1292 = vmatprep.subr.bf16.mxu0 0
  %1293 = vmatpush1.bf16.msra.mxu0 %v976
  %1294 = vmatprep.subr.bf16.mxu0 0
  %1295 = vmatpush1.bf16.msra.mxu0 %v977
  %1296 = vmatprep.subr.bf16.mxu0 0
  %1297 = vmatpush1.bf16.msra.mxu0 %v978
  %1298 = vmatprep.subr.bf16.mxu0 0
  %1299 = vmatpush1.bf16.msra.mxu0 %v979
  %1300 = vmatprep.subr.bf16.mxu0 0
  %1301 = vmatpush1.bf16.msra.mxu0 %v980
  %1302 = vmatprep.subr.bf16.mxu0 0
  %1303 = vmatpush1.bf16.msra.mxu0 %v981
  %1304 = vmatprep.mubr.bf16.mxu0 %v507
  %1305 = vmatmul.mubr.bf16.gmra.mrb[0].mxu0 %v506
  %v1306 = vpop.f32.mrb[0].mxu0
  %v1307 = vadd.f32 %v1210, %v1306
  %v1308 = vpop.f32.mrb[0].mxu0
  %v1309 = vpop.f32.mrb[0].mxu0
  %v1310 = vadd.f32 %v1213, %v1309
  %v1311 = vpop.f32.mrb[0].mxu0
  %1312 = vmatprep.mubr.bf16.mxu0 %v516
  %1313 = vmatmul.mubr.bf16.gmra.mrb[0].mxu0 %v515
  %v1314 = vpop.f32.mrb[0].mxu0
  %v1315 = vadd.f32 %v1218, %v1314
  %v1316 = vpop.f32.mrb[0].mxu0
  %v1317 = vpop.f32.mrb[0].mxu0
  %v1318 = vadd.f32 %v1221, %v1317
  %v1319 = vpop.f32.mrb[0].mxu0
  %1320 = vmatprep.mubr.bf16.mxu0 %v525
  %1321 = vmatmul.mubr.bf16.gmra.mrb[0].mxu0 %v524
  %v1322 = vpop.f32.mrb[0].mxu0
  %v1323 = vadd.f32 %v1226, %v1322
  %v1324 = vpop.f32.mrb[0].mxu0
  %v1325 = vpop.f32.mrb[0].mxu0
  %v1326 = vadd.f32 %v1229, %v1325
  %v1327 = vpop.f32.mrb[0].mxu0
  %1328 = vmatprep.mubr.bf16.mxu0 %v534
  %1329 = vmatmul.mubr.bf16.gmra.mrb[0].mxu0 %v533
  %v1330 = vpop.f32.mrb[0].mxu0
  %v1331 = vadd.f32 %v1234, %v1330
  %v1332 = vpop.f32.mrb[0].mxu0
  %v1333 = vpop.f32.mrb[0].mxu0
  %v1334 = vadd.f32 %v1237, %v1333
  %v1335 = vpop.f32.mrb[0].mxu0
  %1336 = vmatprep.mubr.bf16.mxu0 %v543
  %1337 = vmatmul.mubr.bf16.gmra.mrb[0].mxu0 %v542
  %v1338 = vpop.f32.mrb[0].mxu0
  %v1339 = vadd.f32 %v1242, %v1338
  %v1340 = vpop.f32.mrb[0].mxu0
  %v1341 = vpop.f32.mrb[0].mxu0
  %v1342 = vadd.f32 %v1245, %v1341
  %v1343 = vpop.f32.mrb[0].mxu0
  %1344 = vmatprep.mubr.bf16.mxu0 %v552
  %1345 = vmatmul.mubr.bf16.gmra.mrb[0].mxu0 %v551
  %v1346 = vpop.f32.mrb[0].mxu0
  %v1347 = vadd.f32 %v1250, %v1346
  %v1348 = vpop.f32.mrb[0].mxu0
  %v1349 = vpop.f32.mrb[0].mxu0
  %v1350 = vadd.f32 %v1253, %v1349
  %v1351 = vpop.f32.mrb[0].mxu0
  %1352 = vmatprep.mubr.bf16.mxu0 %v561
  %1353 = vmatmul.mubr.bf16.gmra.mrb[0].mxu0 %v560
  %v1354 = vpop.f32.mrb[0].mxu0
  %v1355 = vadd.f32 %v1258, %v1354
  %v1356 = vpop.f32.mrb[0].mxu0
  %v1357 = vpop.f32.mrb[0].mxu0
  %v1358 = vadd.f32 %v1261, %v1357
  %v1359 = vpop.f32.mrb[0].mxu0
  %1360 = vmatprep.mubr.bf16.mxu0 %v570
  %1361 = vmatmul.mubr.bf16.gmra.mrb[0].mxu0 %v569
  %v1362 = vpop.f32.mrb[0].mxu0
  %v1363 = vadd.f32 %v1266, %v1362
  %v1364 = vpop.f32.mrb[0].mxu0
  %v1365 = vpop.f32.mrb[0].mxu0
  %v1366 = vadd.f32 %v1269, %v1365
  %v1367 = vpop.f32.mrb[0].mxu0
  %1368 = vdwg.mxu0
  %1369 = vmatprep.subr.bf16.mxu0 0
  %1370 = vmatpush1.bf16.msra.mxu0 %v982
  %1371 = vmatprep.subr.bf16.mxu0 0
  %1372 = vmatpush1.bf16.msra.mxu0 %v983
  %1373 = vmatprep.subr.bf16.mxu0 0
  %1374 = vmatpush1.bf16.msra.mxu0 %v984
  %1375 = vmatprep.subr.bf16.mxu0 0
  %1376 = vmatpush1.bf16.msra.mxu0 %v985
  %1377 = vmatprep.subr.bf16.mxu0 0
  %1378 = vmatpush1.bf16.msra.mxu0 %v986
  %1379 = vmatprep.subr.bf16.mxu0 0
  %1380 = vmatpush1.bf16.msra.mxu0 %v987
  %1381 = vmatprep.subr.bf16.mxu0 0
  %1382 = vmatpush1.bf16.msra.mxu0 %v988
  %1383 = vmatprep.subr.bf16.mxu0 0
  %1384 = vmatpush1.bf16.msra.mxu0 %v989
  %1385 = vmatprep.subr.bf16.mxu0 0
  %1386 = vmatpush1.bf16.msra.mxu0 %v990
  %1387 = vmatprep.subr.bf16.mxu0 0
  %1388 = vmatpush1.bf16.msra.mxu0 %v991
  %1389 = vmatprep.subr.bf16.mxu0 0
  %1390 = vmatpush1.bf16.msra.mxu0 %v992
  %1391 = vmatprep.subr.bf16.mxu0 0
  %1392 = vmatpush1.bf16.msra.mxu0 %v993
  %1393 = vmatprep.subr.bf16.mxu0 0
  %1394 = vmatpush1.bf16.msra.mxu0 %v994
  %1395 = vmatprep.subr.bf16.mxu0 0
  %1396 = vmatpush1.bf16.msra.mxu0 %v995
  %1397 = vmatprep.subr.bf16.mxu0 0
  %1398 = vmatpush1.bf16.msra.mxu0 %v996
  %1399 = vmatprep.subr.bf16.mxu0 0
  %1400 = vmatpush1.bf16.msra.mxu0 %v997
  %1401 = vmatprep.mubr.bf16.mxu0 %v509
  %1402 = vmatmul.mubr.bf16.gmra.mrb[0].mxu0 %v508
  %v1403 = vpop.f32.mrb[0].mxu0
  %v1404 = vadd.f32 %v1307, %v1403
  %v1405 = vpop.f32.mrb[0].mxu0
  %v1406 = vpop.f32.mrb[0].mxu0
  %v1407 = vadd.f32 %v1310, %v1406
  %v1408 = vpop.f32.mrb[0].mxu0
  %1409 = vmatprep.mubr.bf16.mxu0 %v518
  %1410 = vmatmul.mubr.bf16.gmra.mrb[0].mxu0 %v517
  %v1411 = vpop.f32.mrb[0].mxu0
  %v1412 = vadd.f32 %v1315, %v1411
  %v1413 = vpop.f32.mrb[0].mxu0
  %v1414 = vpop.f32.mrb[0].mxu0
  %v1415 = vadd.f32 %v1318, %v1414
  %v1416 = vpop.f32.mrb[0].mxu0
  %1417 = vmatprep.mubr.bf16.mxu0 %v527
  %1418 = vmatmul.mubr.bf16.gmra.mrb[0].mxu0 %v526
  %v1419 = vpop.f32.mrb[0].mxu0
  %v1420 = vadd.f32 %v1323, %v1419
  %v1421 = vpop.f32.mrb[0].mxu0
  %v1422 = vpop.f32.mrb[0].mxu0
  %v1423 = vadd.f32 %v1326, %v1422
  %v1424 = vpop.f32.mrb[0].mxu0
  %1425 = vmatprep.mubr.bf16.mxu0 %v536
  %1426 = vmatmul.mubr.bf16.gmra.mrb[0].mxu0 %v535
  %v1427 = vpop.f32.mrb[0].mxu0
  %v1428 = vadd.f32 %v1331, %v1427
  %v1429 = vpop.f32.mrb[0].mxu0
  %v1430 = vpop.f32.mrb[0].mxu0
  %v1431 = vadd.f32 %v1334, %v1430
  %v1432 = vpop.f32.mrb[0].mxu0
  %1433 = vmatprep.mubr.bf16.mxu0 %v545
  %1434 = vmatmul.mubr.bf16.gmra.mrb[0].mxu0 %v544
  %v1435 = vpop.f32.mrb[0].mxu0
  %v1436 = vadd.f32 %v1339, %v1435
  %v1437 = vpop.f32.mrb[0].mxu0
  %v1438 = vpop.f32.mrb[0].mxu0
  %v1439 = vadd.f32 %v1342, %v1438
  %v1440 = vpop.f32.mrb[0].mxu0
  %1441 = vmatprep.mubr.bf16.mxu0 %v554
  %1442 = vmatmul.mubr.bf16.gmra.mrb[0].mxu0 %v553
  %v1443 = vpop.f32.mrb[0].mxu0
  %v1444 = vadd.f32 %v1347, %v1443
  %v1445 = vpop.f32.mrb[0].mxu0
  %v1446 = vpop.f32.mrb[0].mxu0
  %v1447 = vadd.f32 %v1350, %v1446
  %v1448 = vpop.f32.mrb[0].mxu0
  %1449 = vmatprep.mubr.bf16.mxu0 %v563
  %1450 = vmatmul.mubr.bf16.gmra.mrb[0].mxu0 %v562
  %v1451 = vpop.f32.mrb[0].mxu0
  %v1452 = vadd.f32 %v1355, %v1451
  %v1453 = vpop.f32.mrb[0].mxu0
  %v1454 = vpop.f32.mrb[0].mxu0
  %v1455 = vadd.f32 %v1358, %v1454
  %v1456 = vpop.f32.mrb[0].mxu0
  %1457 = vmatprep.mubr.bf16.mxu0 %v572
  %1458 = vmatmul.mubr.bf16.gmra.mrb[0].mxu0 %v571
  %v1459 = vpop.f32.mrb[0].mxu0
  %v1460 = vadd.f32 %v1363, %v1459
  %v1461 = vpop.f32.mrb[0].mxu0
  %v1462 = vpop.f32.mrb[0].mxu0
  %v1463 = vadd.f32 %v1366, %v1462
  %v1464 = vpop.f32.mrb[0].mxu0
  %1465 = vdwg.mxu0
  %1466 = vmatprep.subr.bf16.mxu0 0
  %1467 = vmatpush1.bf16.msra.mxu0 %v998
  %1468 = vmatprep.subr.bf16.mxu0 0
  %1469 = vmatpush1.bf16.msra.mxu0 %v999
  %1470 = vmatprep.subr.bf16.mxu0 0
  %1471 = vmatpush1.bf16.msra.mxu0 %v1000
  %1472 = vmatprep.subr.bf16.mxu0 0
  %1473 = vmatpush1.bf16.msra.mxu0 %v1001
  %1474 = vmatprep.subr.bf16.mxu0 0
  %1475 = vmatpush1.bf16.msra.mxu0 %v1002
  %1476 = vmatprep.subr.bf16.mxu0 0
  %1477 = vmatpush1.bf16.msra.mxu0 %v1003
  %1478 = vmatprep.subr.bf16.mxu0 0
  %1479 = vmatpush1.bf16.msra.mxu0 %v1004
  %1480 = vmatprep.subr.bf16.mxu0 0
  %1481 = vmatpush1.bf16.msra.mxu0 %v1005
  %1482 = vmatprep.subr.bf16.mxu0 0
  %1483 = vmatpush1.bf16.msra.mxu0 0
  %1484 = vmatprep.subr.bf16.mxu0 0
  %1485 = vmatpush1.bf16.msra.mxu0 0
  %1486 = vmatprep.subr.bf16.mxu0 0
  %1487 = vmatpush1.bf16.msra.mxu0 0
  %1488 = vmatprep.subr.bf16.mxu0 0
  %1489 = vmatpush1.bf16.msra.mxu0 0
  %1490 = vmatprep.subr.bf16.mxu0 0
  %1491 = vmatpush1.bf16.msra.mxu0 0
  %1492 = vmatprep.subr.bf16.mxu0 0
  %1493 = vmatpush1.bf16.msra.mxu0 0
  %1494 = vmatprep.subr.bf16.mxu0 0
  %1495 = vmatpush1.bf16.msra.mxu0 0
  %1496 = vmatprep.subr.bf16.mxu0 0
  %1497 = vmatpush1.bf16.msra.mxu0 0
  %1498 = vmatprep.mubr.bf16.mxu0 0
  %1499 = vmatmul.mubr.bf16.gmra.mrb[0].mxu0 %v510
  %v1500 = vpop.f32.mrb[0].mxu0
  %v1501 = vadd.f32 %v1404, %v1500
  %v1502 = vpop.f32.mrb[0].mxu0
  %v1503 = vpop.f32.mrb[0].mxu0
  %v1504 = vadd.f32 %v1407, %v1503
  %v1505 = vpop.f32.mrb[0].mxu0
  %1506 = vmatprep.mubr.bf16.mxu0 0
  %1507 = vmatmul.mubr.bf16.gmra.mrb[0].mxu0 %v519
  %v1508 = vpop.f32.mrb[0].mxu0
  %v1509 = vadd.f32 %v1412, %v1508
  %v1510 = vpop.f32.mrb[0].mxu0
  %v1511 = vpop.f32.mrb[0].mxu0
  %v1512 = vadd.f32 %v1415, %v1511
  %v1513 = vpop.f32.mrb[0].mxu0
  %1514 = vmatprep.mubr.bf16.mxu0 0
  %1515 = vmatmul.mubr.bf16.gmra.mrb[0].mxu0 %v528
  %v1516 = vpop.f32.mrb[0].mxu0
  %v1517 = vadd.f32 %v1420, %v1516
  %v1518 = vpop.f32.mrb[0].mxu0
  %v1519 = vpop.f32.mrb[0].mxu0
  %v1520 = vadd.f32 %v1423, %v1519
  %v1521 = vpop.f32.mrb[0].mxu0
  %1522 = vmatprep.mubr.bf16.mxu0 0
  %1523 = vmatmul.mubr.bf16.gmra.mrb[0].mxu0 %v537
  %v1524 = vpop.f32.mrb[0].mxu0
  %v1525 = vadd.f32 %v1428, %v1524
  %v1526 = vpop.f32.mrb[0].mxu0
  %v1527 = vpop.f32.mrb[0].mxu0
  %v1528 = vadd.f32 %v1431, %v1527
  %v1529 = vpop.f32.mrb[0].mxu0
  %1530 = vmatprep.mubr.bf16.mxu0 0
  %1531 = vmatmul.mubr.bf16.gmra.mrb[0].mxu0 %v546
  %v1532 = vpop.f32.mrb[0].mxu0
  %v1533 = vadd.f32 %v1436, %v1532
  %v1534 = vpop.f32.mrb[0].mxu0
  %v1535 = vpop.f32.mrb[0].mxu0
  %v1536 = vadd.f32 %v1439, %v1535
  %v1537 = vpop.f32.mrb[0].mxu0
  %1538 = vmatprep.mubr.bf16.mxu0 0
  %1539 = vmatmul.mubr.bf16.gmra.mrb[0].mxu0 %v555
  %v1540 = vpop.f32.mrb[0].mxu0
  %v1541 = vadd.f32 %v1444, %v1540
  %v1542 = vpop.f32.mrb[0].mxu0
  %v1543 = vpop.f32.mrb[0].mxu0
  %v1544 = vadd.f32 %v1447, %v1543
  %v1545 = vpop.f32.mrb[0].mxu0
  %1546 = vmatprep.mubr.bf16.mxu0 0
  %1547 = vmatmul.mubr.bf16.gmra.mrb[0].mxu0 %v564
  %v1548 = vpop.f32.mrb[0].mxu0
  %v1549 = vadd.f32 %v1452, %v1548
  %v1550 = vpop.f32.mrb[0].mxu0
  %v1551 = vpop.f32.mrb[0].mxu0
  %v1552 = vadd.f32 %v1455, %v1551
  %v1553 = vpop.f32.mrb[0].mxu0
  %1554 = vmatprep.mubr.bf16.mxu0 0
  %1555 = vmatmul.mubr.bf16.gmra.mrb[0].mxu0 %v573
  %v1556 = vpop.f32.mrb[0].mxu0
  %v1557 = vadd.f32 %v1460, %v1556
  %v1558 = vpop.f32.mrb[0].mxu0
  %v1559 = vpop.f32.mrb[0].mxu0
  %v1560 = vadd.f32 %v1463, %v1559
  %v1561 = vpop.f32.mrb[0].mxu0
  %1562 = vdwg.mxu0
  %v1563 = vadd.f32 %v38, %v1501
  %v1564 = vadd.f32 %v39, %v1504
  %v1565 = vadd.f32 %v40, %v1509
  %v1566 = vadd.f32 %v41, %v1512
  %v1567 = vadd.f32 %v42, %v1517
  %v1568 = vadd.f32 %v43, %v1520
  %v1569 = vadd.f32 %v44, %v1525
  %v1570 = vadd.f32 %v45, %v1528
  %v1571 = vadd.f32 %v46, %v1533
  %v1572 = vadd.f32 %v47, %v1536
  %v1573 = vadd.f32 %v48, %v1541
  %v1574 = vadd.f32 %v49, %v1544
  %v1575 = vadd.f32 %v50, %v1549
  %v1576 = vadd.f32 %v51, %v1552
  %v1577 = vadd.f32 %v52, %v1557
  %v1578 = vadd.f32 %v53, %v1560
  %1579 = vst [vmem:[#allocation2] sm:$0xff] %v1563
  %1580 = vst [vmem:[#allocation2 + $0x8] sm:$0xff] %v1564
  %1581 = vst [vmem:[#allocation2 + $0x10] sm:$0xff] %v1565
  %1582 = vst [vmem:[#allocation2 + $0x18] sm:$0xff] %v1566
  %1583 = vst [vmem:[#allocation2 + $0x20] sm:$0xff] %v1567
  %1584 = vst [vmem:[#allocation2 + $0x28] sm:$0xff] %v1568
  %1585 = vst [vmem:[#allocation2 + $0x30] sm:$0xff] %v1569
  %1586 = vst [vmem:[#allocation2 + $0x38] sm:$0xff] %v1570
  %1587 = vst [vmem:[#allocation2 + $0x40] sm:$0xff] %v1571
  %1588 = vst [vmem:[#allocation2 + $0x48] sm:$0xff] %v1572
  %1589 = vst [vmem:[#allocation2 + $0x50] sm:$0xff] %v1573
  %1590 = vst [vmem:[#allocation2 + $0x58] sm:$0xff] %v1574
  %1591 = vst [vmem:[#allocation2 + $0x60] sm:$0xff] %v1575
  %1592 = vst [vmem:[#allocation2 + $0x68] sm:$0xff] %v1576
  %1593 = vst [vmem:[#allocation2 + $0x70] sm:$0xff] %v1577
  %1594 = vst [vmem:[#allocation2 + $0x78] sm:$0xff] %v1578
  // Predicated region
  $region22: #{resblock_forward.7} parent=0 // pred_check
    %p1595 = pneg %p18
  $region23: #{resblock_forward.7} parent=0 // pred_check_branch
    %1597 = sbr.rel (%p1595) target = $region25
  $region24: #{resblock_forward.7} parent=0 // pred_region
    %v1598 = vld [vmem:[#allocation2] sm:$0xff]
    %v1599 = vld [vmem:[#allocation2 + $0x8] sm:$0xff]
    %v1600 = vld [vmem:[#allocation2 + $0x10] sm:$0xff]
    %v1601 = vld [vmem:[#allocation2 + $0x18] sm:$0xff]
    %v1602 = vld [vmem:[#allocation2 + $0x20] sm:$0xff]
    %v1603 = vld [vmem:[#allocation2 + $0x28] sm:$0xff]
    %v1604 = vld [vmem:[#allocation2 + $0x30] sm:$0xff]
    %v1605 = vld [vmem:[#allocation2 + $0x38] sm:$0xff]
    %v1606 = vld [vmem:[#allocation2 + $0x40] sm:$0xff]
    %v1607 = vld [vmem:[#allocation2 + $0x48] sm:$0xff]
    %v1608 = vld [vmem:[#allocation2 + $0x50] sm:$0xff]
    %v1609 = vld [vmem:[#allocation2 + $0x58] sm:$0xff]
    %v1610 = vld [vmem:[#allocation2 + $0x60] sm:$0xff]
    %v1611 = vld [vmem:[#allocation2 + $0x68] sm:$0xff]
    %v1612 = vld [vmem:[#allocation2 + $0x70] sm:$0xff]
    %v1613 = vld [vmem:[#allocation2 + $0x78] sm:$0xff]
    %v1614 = vld [vmem:[%s2] sm:$0x1]
    %v1616 = vlaneseq
    %v1617 = vshrl.u32 %v1616, 7
    %v1618 = vsub.s32 0, %v1617
    %v1619 = vrot.slane %v1614, %v1618
    %v1621 = vadd.f32 %v1598, %v1619
    %v1622 = vadd.f32 %v1599, %v1619
    %v1623 = vadd.f32 %v1600, %v1619
    %v1624 = vadd.f32 %v1601, %v1619
    %v1625 = vadd.f32 %v1602, %v1619
    %v1626 = vadd.f32 %v1603, %v1619
    %v1627 = vadd.f32 %v1604, %v1619
    %v1628 = vadd.f32 %v1605, %v1619
    %v1629 = vadd.f32 %v1606, %v1619
    %v1630 = vadd.f32 %v1607, %v1619
    %v1631 = vadd.f32 %v1608, %v1619
    %v1632 = vadd.f32 %v1609, %v1619
    %v1633 = vadd.f32 %v1610, %v1619
    %v1634 = vadd.f32 %v1611, %v1619
    %v1635 = vadd.f32 %v1612, %v1619
    %v1636 = vadd.f32 %v1613, %v1619
    %v1637 = vmul.f32 %v1621, 0.1
    %v1638 = vmul.f32 %v1622, 0.1
    %v1639 = vmul.f32 %v1623, 0.1
    %v1640 = vmul.f32 %v1624, 0.1
    %v1641 = vmul.f32 %v1625, 0.1
    %v1642 = vmul.f32 %v1626, 0.1
    %v1643 = vmul.f32 %v1627, 0.1
    %v1644 = vmul.f32 %v1628, 0.1
    %v1645 = vmul.f32 %v1629, 0.1
    %v1646 = vmul.f32 %v1630, 0.1
    %v1647 = vmul.f32 %v1631, 0.1
    %v1648 = vmul.f32 %v1632, 0.1
    %v1649 = vmul.f32 %v1633, 0.1
    %v1650 = vmul.f32 %v1634, 0.1
    %v1651 = vmul.f32 %v1635, 0.1
    %v1652 = vmul.f32 %v1636, 0.1
    %v1653 = vmax.f32 %v1621, %v1637
    %v1654 = vmax.f32 %v1622, %v1638
    %v1655 = vmax.f32 %v1623, %v1639
    %v1656 = vmax.f32 %v1624, %v1640
    %v1657 = vmax.f32 %v1625, %v1641
    %v1658 = vmax.f32 %v1626, %v1642
    %v1659 = vmax.f32 %v1627, %v1643
    %v1660 = vmax.f32 %v1628, %v1644
    %v1661 = vmax.f32 %v1629, %v1645
    %v1662 = vmax.f32 %v1630, %v1646
    %v1663 = vmax.f32 %v1631, %v1647
    %v1664 = vmax.f32 %v1632, %v1648
    %v1665 = vmax.f32 %v1633, %v1649
    %v1666 = vmax.f32 %v1634, %v1650
    %v1667 = vmax.f32 %v1635, %v1651
    %v1668 = vmax.f32 %v1636, %v1652
    %v1669 = vld [vmem:[%s3] sm:$0xf]
    %v1670 = vld [vmem:[%s3 + $0x4] sm:$0xf]
    %v1671 = vld [vmem:[%s3 + $0x8] sm:$0xf]
    %v1672 = vld [vmem:[%s3 + $0xc] sm:$0xf]
    %v1673 = vld [vmem:[%s3 + $0x10] sm:$0xf]
    %v1674 = vld [vmem:[%s3 + $0x14] sm:$0xf]
    %v1675 = vld [vmem:[%s3 + $0x18] sm:$0xf]
    %v1676 = vld [vmem:[%s3 + $0x1c] sm:$0xf]
    %v1677 = vld [vmem:[%s3 + $0x20] sm:$0xf]
    %v1678 = vld [vmem:[%s3 + $0x24] sm:$0xf]
    %v1679 = vld [vmem:[%s3 + $0x28] sm:$0xf]
    %v1680 = vld [vmem:[%s3 + $0x2c] sm:$0xf]
    %v1681 = vld [vmem:[%s3 + $0x30] sm:$0xf]
    %v1682 = vld [vmem:[%s3 + $0x34] sm:$0xf]
    %v1683 = vld [vmem:[%s3 + $0x38] sm:$0xf]
    %v1684 = vld [vmem:[%s3 + $0x3c] sm:$0xf]
    %v1685 = vunpack.c.l.bf16 %v1669
    %v1686 = vunpack.c.l.bf16 %v1670
    %v1687 = vunpack.c.l.bf16 %v1671
    %v1688 = vunpack.c.l.bf16 %v1672
    %v1689 = vunpack.c.l.bf16 %v1673
    %v1690 = vunpack.c.l.bf16 %v1674
    %v1691 = vunpack.c.l.bf16 %v1675
    %v1692 = vunpack.c.l.bf16 %v1676
    %v1693 = vunpack.c.l.bf16 %v1677
    %v1694 = vunpack.c.l.bf16 %v1678
    %v1695 = vunpack.c.l.bf16 %v1679
    %v1696 = vunpack.c.l.bf16 %v1680
    %v1697 = vunpack.c.l.bf16 %v1681
    %v1698 = vunpack.c.l.bf16 %v1682
    %v1699 = vunpack.c.l.bf16 %v1683
    %v1700 = vunpack.c.l.bf16 %v1684
    %v1701 = vadd.f32 %v1685, %v1653
    %v1702 = vadd.f32 %v1686, %v1654
    %v1703 = vadd.f32 %v1687, %v1655
    %v1704 = vadd.f32 %v1688, %v1656
    %v1705 = vadd.f32 %v1689, %v1657
    %v1706 = vadd.f32 %v1690, %v1658
    %v1707 = vadd.f32 %v1691, %v1659
    %v1708 = vadd.f32 %v1692, %v1660
    %v1709 = vadd.f32 %v1693, %v1661
    %v1710 = vadd.f32 %v1694, %v1662
    %v1711 = vadd.f32 %v1695, %v1663
    %v1712 = vadd.f32 %v1696, %v1664
    %v1713 = vadd.f32 %v1697, %v1665
    %v1714 = vadd.f32 %v1698, %v1666
    %v1715 = vadd.f32 %v1699, %v1667
    %v1716 = vadd.f32 %v1700, %v1668
    %v1717 = vpack.c.bf16 %v1702, %v1701
    %v1718 = vpack.c.bf16 %v1704, %v1703
    %v1719 = vpack.c.bf16 %v1706, %v1705
    %v1720 = vpack.c.bf16 %v1708, %v1707
    %v1721 = vpack.c.bf16 %v1710, %v1709
    %v1722 = vpack.c.bf16 %v1712, %v1711
    %v1723 = vpack.c.bf16 %v1714, %v1713
    %v1724 = vpack.c.bf16 %v1716, %v1715
    %v1733 = vunpack.c.l.b16 %v1717
    %v1734 = vunpack.c.h.b16 %v1717
    %v1735 = vunpack.c.l.b16 %v1718
    %v1736 = vunpack.c.h.b16 %v1718
    %v1737 = vunpack.c.l.b16 %v1719
    %v1738 = vunpack.c.h.b16 %v1719
    %v1739 = vunpack.c.l.b16 %v1720
    %v1740 = vunpack.c.h.b16 %v1720
    %v1741 = vunpack.c.l.b16 %v1721
    %v1742 = vunpack.c.h.b16 %v1721
    %v1743 = vunpack.c.l.b16 %v1722
    %v1744 = vunpack.c.h.b16 %v1722
    %v1745 = vunpack.c.l.b16 %v1723
    %v1746 = vunpack.c.h.b16 %v1723
    %v1747 = vunpack.c.l.b16 %v1724
    %v1748 = vunpack.c.h.b16 %v1724
    %v1749 = vpack.c.b16 %v1733, %v1733
    %v1750 = vpack.c.b16 %v1734, %v1734
    %v1751 = vpack.c.b16 %v1735, %v1735
    %v1752 = vpack.c.b16 %v1736, %v1736
    %v1753 = vpack.c.b16 %v1737, %v1737
    %v1754 = vpack.c.b16 %v1738, %v1738
    %v1755 = vpack.c.b16 %v1739, %v1739
    %v1756 = vpack.c.b16 %v1740, %v1740
    %v1757 = vpack.c.b16 %v1741, %v1741
    %v1758 = vpack.c.b16 %v1742, %v1742
    %v1759 = vpack.c.b16 %v1743, %v1743
    %v1760 = vpack.c.b16 %v1744, %v1744
    %v1761 = vpack.c.b16 %v1745, %v1745
    %v1762 = vpack.c.b16 %v1746, %v1746
    %v1763 = vpack.c.b16 %v1747, %v1747
    %v1764 = vpack.c.b16 %v1748, %v1748
    %1781 = vst [vmem:[%s4] sm:$0xf] %v1749
    %1782 = vst [vmem:[%s4 + $0x4] sm:$0xf] %v1750
    %1783 = vst [vmem:[%s4 + $0x8] sm:$0xf] %v1751
    %1784 = vst [vmem:[%s4 + $0xc] sm:$0xf] %v1752
    %1785 = vst [vmem:[%s4 + $0x10] sm:$0xf] %v1753
    %1786 = vst [vmem:[%s4 + $0x14] sm:$0xf] %v1754
    %1787 = vst [vmem:[%s4 + $0x18] sm:$0xf] %v1755
    %1788 = vst [vmem:[%s4 + $0x1c] sm:$0xf] %v1756
    %1789 = vst [vmem:[%s4 + $0x20] sm:$0xf] %v1757
    %1790 = vst [vmem:[%s4 + $0x24] sm:$0xf] %v1758
    %1791 = vst [vmem:[%s4 + $0x28] sm:$0xf] %v1759
    %1792 = vst [vmem:[%s4 + $0x2c] sm:$0xf] %v1760
    %1793 = vst [vmem:[%s4 + $0x30] sm:$0xf] %v1761
    %1794 = vst [vmem:[%s4 + $0x34] sm:$0xf] %v1762
    %1795 = vst [vmem:[%s4 + $0x38] sm:$0xf] %v1763
    %1796 = vst [vmem:[%s4 + $0x3c] sm:$0xf] %v1764
  $region25: #{resblock_forward.7} parent=0 // pred_fallthru
    _
  // Predicated region
  $region26: #{resblock_forward.7} parent=0 // pred_check
    _
  $region27: #{resblock_forward.7} parent=0 // pred_check_branch
    %1798 = sbr.rel (0) target = $region29
  $region28: #{resblock_forward.7} parent=0 // pred_region
    _
  $region29: #{resblock_forward.7} parent=0 // pred_fallthru
    _
  // Predicated region
  $region30: #{resblock_forward.7} parent=0 // pred_check
    _
  $region31: #{resblock_forward.7} parent=0 // pred_check_branch
    %1800 = sbr.rel (0) target = $region33
  $region32: #{resblock_forward.7} parent=0 // pred_region
    _
  $region33: #{resblock_forward.7} parent=0 // pred_fallthru
    _

</llo_original>
